<compile_context>
chip_gen: v5e
topology: v5e:2x2
jax: 0.10.0
libtpu: 0.0.40
codegen_flags: <defaults>
</compile_context>

<pallas_src>
import jax
import jax.numpy as jnp
from jax import lax
from jax.experimental import pallas as pl
from jax.experimental.pallas import tpu as pltpu

_LANES = 128
_BN_EPS = 1e-5
_MAX_ROWS_PER_BLOCK = 1024   # M-tile size once M outgrows a single block


# ---------------------------------------------------------------------------
# Pallas kernel: one lane-dense matmul (bias folded into weights) + ReLU.
# ---------------------------------------------------------------------------
def fused_conv_kernel(p_ref, w_ref, o_ref):
    acc = jnp.dot(p_ref[...], w_ref[...], preferred_element_type=jnp.float32)
    o_ref[...] = jnp.maximum(acc, 0.0).astype(o_ref.dtype)


# ---------------------------------------------------------------------------
# Host-side algebra: fold BN into conv1, then compose conv1 ∘ conv2 into one
# effective 7x7 valid conv.  Done once, outside the kernel.
# ---------------------------------------------------------------------------
def _compose_effective_conv(params, eps=_BN_EPS):
    w1, b1, gamma, beta, mean, var, w2, b2 = params
    inv_std = gamma / jnp.sqrt(var + eps)                 # (3,)
    w1f = w1 * inv_std                                    # scale conv1 out-chans
    b1f = (b1 - mean) * inv_std + beta                    # folded conv1 bias

    k1h, k1w, cin, _ = w1.shape
    k2h, k2w, _, cout = w2.shape
    kh, kw = k1h + k2h - 1, k1w + k2w - 1                 # 7, 7

    w_eff = jnp.zeros((kh, kw, cin, cout), jnp.float32)
    for i in range(k2h):
        for j in range(k2w):
            tap = jnp.einsum('hwim,mo->hwio', w1f, w2[i, j])   # (3,3,Cin,4)
            w_eff = w_eff.at[i:i + k1h, j:j + k1w].add(tap)
    b_eff = b2 + jnp.einsum('hwmo,m->o', w2, b1f)
    return w_eff, b_eff


def _im2col_valid_with_bias_col(x_nhwc, kh, kw):
    """(B,H,W,C) -> (B*oh*ow, kh*kw*C + 1) patches with trailing ones column.

    Feature order is (kh, kw, c), matching w_eff.reshape(kh*kw*C, cout).
    """
    B, H, W, C = x_nhwc.shape
    oh, ow = H - kh + 1, W - kw + 1
    cols = [x_nhwc[:, i:i + oh, j:j + ow, :]
            for i in range(kh) for j in range(kw)]
    cols.append(jnp.ones((B, oh, ow, 1), x_nhwc.dtype))    # bias column
    patches = jnp.concatenate(cols, axis=-1)               # (B,oh,ow,K+1)
    return patches.reshape(B * oh * ow, kh * kw * C + 1), (oh, ow)


def mixed_precision_net(x_nhwc, params):
    """x_nhwc: (B, H, W, Cin) f32.  Returns (B, H-6, W-6, 4) f32."""
    w_eff, b_eff = _compose_effective_conv(params)
    kh, kw, _, cout = w_eff.shape
    k_conv = kh * kw * w_eff.shape[2]                      # 196

    patches, (oh, ow) = _im2col_valid_with_bias_col(x_nhwc, kh, kw)
    M, k_aug = patches.shape                               # (200, 197)

    # Lane-aligned K padding (196+1 -> 256); bias column sits at index 196.
    k_pad = pl.cdiv(k_aug, _LANES) * _LANES

    # M tiling: single block when small; tile + pad when M grows.
    m_aligned = pl.cdiv(M, 8) * 8
    if m_aligned <= _MAX_ROWS_PER_BLOCK:
        tile_m, m_pad = m_aligned, m_aligned
    else:
        tile_m = _MAX_ROWS_PER_BLOCK
        m_pad = pl.cdiv(m_aligned, tile_m) * tile_m
    num_blocks = m_pad // tile_m

    # Single jnp.pad per operand; fused into the pallas_call operands below.
    patches_p = jnp.pad(patches, ((0, m_pad - M), (0, k_pad - k_aug)))
    w_aug = jnp.concatenate(
        [w_eff.reshape(k_conv, cout), b_eff.reshape(1, cout)], axis=0)
    w_p = jnp.pad(w_aug, ((0, k_pad - k_aug), (0, 0)))     # (256, 4)

    # Explicit scoped-VMEM budget (portable across v5e/v6e/v7x defaults).
    vmem_bytes = 2 * 4 * (tile_m * k_pad + k_pad * cout + tile_m * cout)
    vmem_limit = min(max(vmem_bytes + (1 << 20), 4 << 20), 32 << 20)

    out = pl.pallas_call(
        fused_conv_kernel,
        out_shape=jax.ShapeDtypeStruct((m_pad, cout), jnp.float32),
        grid_spec=pltpu.PrefetchScalarGridSpec(
            num_scalar_prefetch=0,
            grid=(num_blocks,),
            in_specs=[
                pl.BlockSpec((tile_m, k_pad), lambda i: (i, 0)),   # patches
                pl.BlockSpec((k_pad, cout), lambda i: (0, 0)),     # w (+bias)
            ],
            out_specs=pl.BlockSpec((tile_m, cout), lambda i: (i, 0)),
        ),
        compiler_params=pltpu.CompilerParams(
            dimension_semantics=("parallel",),
            allow_input_fusion=[True, True],
            vmem_limit_bytes=vmem_limit),
    )(patches_p, w_p)

    if m_pad != M:
        out = out[:M]
    B = x_nhwc.shape[0]
    return out.reshape(B, oh, ow, cout)


# ---------------------------------------------------------------------------
# Pure-JAX reference (un-fused lax.conv path) for correctness checking.
# ---------------------------------------------------------------------------
def reference_forward(x_nhwc, params, eps=_BN_EPS):
    w1, b1, gamma, beta, mean, var, w2, b2 = params
    dn = ("NHWC", "HWIO", "NHWC")
    y = lax.conv_general_dilated(x_nhwc, w1, (1, 1), "VALID",
                                 dimension_numbers=dn) + b1
    y = (y - mean) * (gamma / jnp.sqrt(var + eps)) + beta
    y = lax.conv_general_dilated(y, w2, (1, 1), "VALID",
                                 dimension_numbers=dn) + b2
    return jnp.maximum(y, 0.0)


def make_params(key, in_channels):
    ks = jax.random.split(key, 8)
    # conv1: Cin -> 3, kernel 3x3 (HWIO); bias (3,) like PyTorch.
    w1 = jax.random.normal(ks[0], (3, 3, in_channels, 3), jnp.float32) * 0.1
    b1 = jax.random.normal(ks[1], (3,), jnp.float32) * 0.1
    # BatchNorm2d(3) inference-mode parameters.
    gamma = 1.0 + 0.1 * jax.random.normal(ks[2], (3,), jnp.float32)
    beta = 0.1 * jax.random.normal(ks[3], (3,), jnp.float32)
    running_mean = 0.1 * jax.random.normal(ks[4], (3,), jnp.float32)
    running_var = jnp.abs(1.0 + 0.1 * jax.random.normal(ks[5], (3,), jnp.float32))
    # conv2: 3 -> 4, kernel 5x5 (HWIO); bias (4,).
    w2 = jax.random.normal(ks[6], (5, 5, 3, 4), jnp.float32) * 0.1
    b2 = jax.random.normal(ks[7], (4,), jnp.float32) * 0.1
    return (w1, b1, gamma, beta, running_mean, running_var, w2, b2)


if __name__ == "__main__":
    key = jax.random.PRNGKey(0)
    k_x, k_p = jax.random.split(key)

    # PyTorch-equivalent input: NCHW (2, 4, 16, 16); kernel works in NHWC.
    B, Cin, H, W = 2, 4, 16, 16
    x_nchw = jax.random.normal(k_x, (B, Cin, H, W), jnp.float32)
    x_nhwc = jnp.transpose(x_nchw, (0, 2, 3, 1))

    params = make_params(k_p, Cin)

    fwd = jax.jit(mixed_precision_net)
    out_nhwc = jax.block_until_ready(fwd(x_nhwc, params))

    # Back to PyTorch's NCHW convention: (2, 4, 10, 10).
    out_nchw = jnp.transpose(out_nhwc, (0, 3, 1, 2))
    assert out_nchw.shape == (B, 4, H - 6, W - 6), out_nchw.shape

    # Sanity check vs pure-JAX un-fused conv reference.
    ref = reference_forward(x_nhwc, params)
    max_err = float(jnp.max(jnp.abs(out_nhwc - ref)))
    assert jnp.allclose(out_nhwc, ref, rtol=1e-4, atol=1e-4), max_err

    print("KERNEL_OK")
</pallas_src>

<mosaic_0001>
module attributes {stable_mosaic.version = 11 : i64} {
  func.func @fused_conv_kernel(%arg0: i32, %arg1: memref<200x256xf32, #tpu.memory_space<vmem>>, %arg2: memref<256x4xf32, #tpu.memory_space<vmem>>, %arg3: memref<200x4xf32, #tpu.memory_space<vmem>>) attributes {dimension_semantics = [#tpu.dimension_semantics<parallel>], iteration_bounds = array<i64: 1>, scalar_prefetch = 0 : i64, scratch_operands = 0 : i64, tpu.core_type = #tpu.core_type<tc>, window_params = [{transform_indices = @transform_0, window_bounds = array<i64: 200, 256>}, {pipeline_mode = #tpu.pipeline_mode<synchronous>, transform_indices = @transform_1, window_bounds = array<i64: 256, 4>}, {transform_indices = @transform_2, window_bounds = array<i64: 200, 4>}]} {
    %c0 = arith.constant 0 : index
    %c0_0 = arith.constant 0 : index
    %0 = vector.load %arg1[%c0, %c0_0] : memref<200x256xf32, #tpu.memory_space<vmem>>, vector<200x256xf32>
    %c0_1 = arith.constant 0 : index
    %c0_2 = arith.constant 0 : index
    %1 = vector.load %arg2[%c0_1, %c0_2] : memref<256x4xf32, #tpu.memory_space<vmem>>, vector<256x4xf32>
    %cst = arith.constant dense<0.000000e+00> : vector<200x4xf32>
    %2 = tpu.matmul %0, %1, %cst {dimension_numbers = #tpu.dot_dimension_numbers<[1], [0], [0], [1], [0, 0, 1, 1], [], []>} : vector<200x256xf32>, vector<256x4xf32>, vector<200x4xf32> -> vector<200x4xf32>
    %cst_3 = arith.constant 0.000000e+00 : f32
    %3 = vector.broadcast %cst_3 : f32 to vector<200x4xf32>
    %4 = arith.maximumf %2, %3 : vector<200x4xf32>
    %c0_4 = arith.constant 0 : index
    %c0_5 = arith.constant 0 : index
    %5 = vector.load %arg3[%c0_4, %c0_5] : memref<200x4xf32, #tpu.memory_space<vmem>>, vector<200x4xf32>
    tpu.vector_store %arg3[%c0_4, %c0_5], %4 {strides = array<i32>} : memref<200x4xf32, #tpu.memory_space<vmem>>, vector<200x4xf32>,
    return
  }
  func.func @transform_0(%arg0: i32) -> (i32, i32) {
    %c0_i32 = arith.constant 0 : i32
    %c0_i32_0 = arith.constant 0 : i32
    return %arg0, %c0_i32 : i32, i32
  }
  func.func @transform_1(%arg0: i32) -> (i32, i32) {
    %c0_i32 = arith.constant 0 : i32
    %c0_i32_0 = arith.constant 0 : i32
    %c0_i32_1 = arith.constant 0 : i32
    return %c0_i32, %c0_i32_0 : i32, i32
  }
  func.func @transform_2(%arg0: i32) -> (i32, i32) {
    %c0_i32 = arith.constant 0 : i32
    %c0_i32_0 = arith.constant 0 : i32
    return %arg0, %c0_i32 : i32, i32
  }
}

</mosaic_0001>

<llo_original>
// kernel: mixed_precision_net.2
$region0: #{mixed_precision_net.2}
  #allocation0 [shape = 'u32[]', space=smem, size = 0x4, offset = 0x4, fixed_abs, tag = 'smem constant byte address 0x4 - core index']
  #allocation1 [shape = 'u32[72,128]{1,0:T(1,128)}', space=vmem, size = 0x9000, scoped, tag = 'internal scratch']
  #allocation2 [shape = 'u32[2048]{0}', space=vmem, size = 0x2000, scoped, tag = 'scoped memory for mixed_precision_net.2']
  #allocation3 [shape = 'u32[2048]{0}', space=vmem, size = 0x2000, scoped, tag = 'scoped memory for mixed_precision_net.2']
  #allocation4 [shape = 'u32[2048]{0}', space=vmem, size = 0x2000, scoped, tag = 'scoped memory for mixed_precision_net.2']
  #allocation5 [shape = 'u32[2048]{0}', space=vmem, size = 0x2000, scoped, tag = 'scoped memory for mixed_precision_net.2']
  #allocation6 [shape = 'u32[2048]{0}', space=vmem, size = 0x2000, scoped, tag = 'scoped memory for mixed_precision_net.2']
  #allocation7 [shape = 'u32[2048]{0}', space=vmem, size = 0x2000, scoped, tag = 'scoped memory for mixed_precision_net.2']
  #allocation8 [shape = 'u32[2048]{0}', space=vmem, size = 0x2000, scoped, tag = 'scoped memory for mixed_precision_net.2']
  #allocation9 [shape = 'u32[2048]{0}', space=vmem, size = 0x2000, scoped, tag = 'scoped memory for mixed_precision_net.2']
  #allocation10 [shape = 'u32[2048]{0}', space=vmem, size = 0x2000, scoped, tag = 'scoped memory for mixed_precision_net.2']
  #allocation11 [shape = 'u32[2048]{0}', space=vmem, size = 0x2000, scoped, tag = 'scoped memory for mixed_precision_net.2']
  #allocation12 [shape = 'u32[2048]{0}', space=vmem, size = 0x2000, scoped, tag = 'scoped memory for mixed_precision_net.2']
  #allocation13 [shape = 'u32[2048]{0}', space=vmem, size = 0x2000, scoped, tag = 'scoped memory for mixed_precision_net.2']
  #allocation14 [shape = 'u32[2048]{0}', space=vmem, size = 0x2000, scoped, tag = 'scoped memory for mixed_precision_net.2']
  #allocation15 [shape = 'u32[2048]{0}', space=vmem, size = 0x2000, scoped, tag = 'scoped memory for mixed_precision_net.2']
  #allocation16 [shape = 'u32[2048]{0}', space=vmem, size = 0x2000, scoped, tag = 'scoped memory for mixed_precision_net.2']
  %s0 = inlined_call_operand.vmem [shape: f32[200,197], index: 0, kind: input, shape index: {}]
  %s1 = inlined_call_operand.<no memory space> [shape: f32[], index: 1, kind: input, shape index: {}]
  %s2 = inlined_call_operand.vmem [shape: f32[1,4], index: 2, kind: input, shape index: {}]
  %s3 = inlined_call_operand.<no memory space> [shape: f32[], index: 3, kind: input, shape index: {}]
  %s4 = inlined_call_operand.vmem [shape: f32[196,4], index: 4, kind: input, shape index: {}]
  %s5 = inlined_call_operand.<no memory space> [shape: s32[], index: 5, kind: input, shape index: {}]
  %s6 = inlined_call_operand.vmem [shape: f32[200,4], index: 6, kind: output, shape index: {}]
  %s7 = sld [smem:[#allocation0]]
  $region22: #{mixed_precision_net.2} parent=0
    _
  %s9 = ssub.s32 1, %s7
  %s10 = scalar_select 0, %s9, %s7
  %v11 = vstv %s1
  %v12 = vstv %s3
  %v13 = vstv %s3
  %v14 = vstv %s1
  %v15 = vstv %s5
  $region1: #{mixed_precision_net.2} parent=0
    #allocation17 [shape = 'u8[204800]{0}', space=vmem, size = 0x32000, dematerialized = true, scoped, tag = 'FusionAdapter Buffer %fusion.1 = f32[200,256]{1,0:T(8,128)} fusion(%param_0.5, %param_1.6), kind=kLoop, calls=%fused_computation.1.clone, metadata={op_name="jit(mixed_precision_net)/jit(_pad)/pad" stack_frame_id=25}']
    #allocation18 [shape = 'u8[131072]{0}', space=vmem, size = 0x20000, dematerialized = true, scoped, tag = 'FusionAdapter Buffer %select_maximum_fusion.1 = f32[256,4]{1,0:T(8,128)} fusion(%param_2.11, %param_3.8, %param_4.9, %param_1.6, %param_5.6), kind=kLoop, calls=%fused_computation.2.clone.clone, metadata={op_name="jit(mixed_precision_net)/concatenate" stack_frame_id=28}']
    // Predicated region
    $region2: #{mixed_precision_net.2} parent=1 // pred_check
      _
    $region3: #{mixed_precision_net.2} parent=1 // pred_check_branch
      %17 = sbr.rel (0) target = $region5
    $region4: #{mixed_precision_net.2} parent=1 // pred_region
      _
    $region5: #{mixed_precision_net.2} parent=1 // pred_fallthru
      _
    // Predicated region
    $region6: #{mixed_precision_net.2} parent=1 // pred_check
      _
    $region7: #{mixed_precision_net.2} parent=1 // pred_check_branch
      %19 = sbr.rel (0) target = $region9
    $region8: #{mixed_precision_net.2} parent=1 // pred_region
      %s21 = ssub.s32 1, 0
      %p22 = scmp.lt.s32.totalorder 0, 0
      %s23 = scalar_select %p22, 0, 0
      %s24 = scalar_lea.vmem %s2, %s23
      %s26 = ssub.s32 1, 0
    $region9: #{mixed_precision_net.2} parent=1 // pred_fallthru
      _
    // Predicated region
    $region10: #{mixed_precision_net.2} parent=1 // pred_check
      _
    $region11: #{mixed_precision_net.2} parent=1 // pred_check_branch
      %28 = sbr.rel (0) target = $region13
    $region12: #{mixed_precision_net.2} parent=1 // pred_region
      _
    $region13: #{mixed_precision_net.2} parent=1 // pred_fallthru
      _
    %s30 = ssub.s32 1, 0
    %p31 = scmp.lt.s32.totalorder 0, 0
    %s32 = scalar_select %p31, 0, 0
    %s33 = scalar_lea.vmem %s2, %s32
    %s35 = ssub.s32 1, 0
    %p36 = scmp.lt.s32.totalorder 0, 0
    %s37 = scalar_select %p36, 0, 0
    %s38 = scalar_lea.vmem %s2, %s37
    %s40 = ssub.s32 1, 0
    %v41 = vld [vmem:[%s0] sm:$0xff]
    %v42 = vlaneseq
    %v43 = vand.u32 %v42, 127
    %vm45 = vcmp.lt.s32.totalorder %v43, 197
    %v46 = vsel %vm45, %v41, %v11
    %s48 = ssub.s32 256, 1
    %49 = vst [vmem:[#allocation17] sm:%s48] %v46
    %s50 = scalar_lea.vmem %s0, 8
    %v51 = vld [vmem:[%s50] sm:$0xff]
    %v52 = vlaneseq
    %v53 = vand.u32 %v52, 127
    %v54 = vadd.s32 %v53, 128
    %vm55 = vcmp.lt.s32.totalorder %v54, 197
    %v56 = vsel %vm55, %v51, %v11
    %s57 = scalar_lea.vmem [#allocation17], 8
    %s59 = ssub.s32 256, 1
    %60 = vst [vmem:[%s57] sm:%s59] %v56
    %s61 = scalar_lea.vmem %s0, 16
    %v62 = vld [vmem:[%s61] sm:$0xff]
    %v63 = vlaneseq
    %v64 = vand.u32 %v63, 127
    %vm66 = vcmp.lt.s32.totalorder %v64, 197
    %v67 = vsel %vm66, %v62, %v11
    %s68 = scalar_lea.vmem [#allocation17], 16
    %s70 = ssub.s32 256, 1
    %71 = vst [vmem:[%s68] sm:%s70] %v67
    %s72 = scalar_lea.vmem %s0, 24
    %v73 = vld [vmem:[%s72] sm:$0xff]
    %v74 = vlaneseq
    %v75 = vand.u32 %v74, 127
    %v76 = vadd.s32 %v75, 128
    %vm77 = vcmp.lt.s32.totalorder %v76, 197
    %v78 = vsel %vm77, %v73, %v11
    %s79 = scalar_lea.vmem [#allocation17], 24
    %s81 = ssub.s32 256, 1
    %82 = vst [vmem:[%s79] sm:%s81] %v78
    %s83 = scalar_lea.vmem %s0, 32
    %v84 = vld [vmem:[%s83] sm:$0xff]
    %v85 = vlaneseq
    %v86 = vand.u32 %v85, 127
    %vm88 = vcmp.lt.s32.totalorder %v86, 197
    %v89 = vsel %vm88, %v84, %v11
    %s90 = scalar_lea.vmem [#allocation17], 32
    %s92 = ssub.s32 256, 1
    %93 = vst [vmem:[%s90] sm:%s92] %v89
    %s94 = scalar_lea.vmem %s0, 40
    %v95 = vld [vmem:[%s94] sm:$0xff]
    %v96 = vlaneseq
    %v97 = vand.u32 %v96, 127
    %v98 = vadd.s32 %v97, 128
    %vm99 = vcmp.lt.s32.totalorder %v98, 197
    %v100 = vsel %vm99, %v95, %v11
    %s101 = scalar_lea.vmem [#allocation17], 40
    %s103 = ssub.s32 256, 1
    %104 = vst [vmem:[%s101] sm:%s103] %v100
    %s105 = scalar_lea.vmem %s0, 48
    %v106 = vld [vmem:[%s105] sm:$0xff]
    %v107 = vlaneseq
    %v108 = vand.u32 %v107, 127
    %vm110 = vcmp.lt.s32.totalorder %v108, 197
    %v111 = vsel %vm110, %v106, %v11
    %s112 = scalar_lea.vmem [#allocation17], 48
    %s114 = ssub.s32 256, 1
    %115 = vst [vmem:[%s112] sm:%s114] %v111
    %s116 = scalar_lea.vmem %s0, 56
    %v117 = vld [vmem:[%s116] sm:$0xff]
    %v118 = vlaneseq
    %v119 = vand.u32 %v118, 127
    %v120 = vadd.s32 %v119, 128
    %vm121 = vcmp.lt.s32.totalorder %v120, 197
    %v122 = vsel %vm121, %v117, %v11
    %s123 = scalar_lea.vmem [#allocation17], 56
    %s125 = ssub.s32 256, 1
    %126 = vst [vmem:[%s123] sm:%s125] %v122
    %s127 = scalar_lea.vmem %s0, 64
    %v128 = vld [vmem:[%s127] sm:$0xff]
    %v129 = vlaneseq
    %v130 = vand.u32 %v129, 127
    %vm132 = vcmp.lt.s32.totalorder %v130, 197
    %v133 = vsel %vm132, %v128, %v11
    %s134 = scalar_lea.vmem [#allocation17], 64
    %s136 = ssub.s32 256, 1
    %137 = vst [vmem:[%s134] sm:%s136] %v133
    %s138 = scalar_lea.vmem %s0, 72
    %v139 = vld [vmem:[%s138] sm:$0xff]
    %v140 = vlaneseq
    %v141 = vand.u32 %v140, 127
    %v142 = vadd.s32 %v141, 128
    %vm143 = vcmp.lt.s32.totalorder %v142, 197
    %v144 = vsel %vm143, %v139, %v11
    %s145 = scalar_lea.vmem [#allocation17], 72
    %s147 = ssub.s32 256, 1
    %148 = vst [vmem:[%s145] sm:%s147] %v144
    %s149 = scalar_lea.vmem %s0, 80
    %v150 = vld [vmem:[%s149] sm:$0xff]
    %v151 = vlaneseq
    %v152 = vand.u32 %v151, 127
    %vm154 = vcmp.lt.s32.totalorder %v152, 197
    %v155 = vsel %vm154, %v150, %v11
    %s156 = scalar_lea.vmem [#allocation17], 80
    %s158 = ssub.s32 256, 1
    %159 = vst [vmem:[%s156] sm:%s158] %v155
    %s160 = scalar_lea.vmem %s0, 88
    %v161 = vld [vmem:[%s160] sm:$0xff]
    %v162 = vlaneseq
    %v163 = vand.u32 %v162, 127
    %v164 = vadd.s32 %v163, 128
    %vm165 = vcmp.lt.s32.totalorder %v164, 197
    %v166 = vsel %vm165, %v161, %v11
    %s167 = scalar_lea.vmem [#allocation17], 88
    %s169 = ssub.s32 256, 1
    %170 = vst [vmem:[%s167] sm:%s169] %v166
    %s171 = scalar_lea.vmem %s0, 96
    %v172 = vld [vmem:[%s171] sm:$0xff]
    %v173 = vlaneseq
    %v174 = vand.u32 %v173, 127
    %vm176 = vcmp.lt.s32.totalorder %v174, 197
    %v177 = vsel %vm176, %v172, %v11
    %s178 = scalar_lea.vmem [#allocation17], 96
    %s180 = ssub.s32 256, 1
    %181 = vst [vmem:[%s178] sm:%s180] %v177
    %s182 = scalar_lea.vmem %s0, 104
    %v183 = vld [vmem:[%s182] sm:$0xff]
    %v184 = vlaneseq
    %v185 = vand.u32 %v184, 127
    %v186 = vadd.s32 %v185, 128
    %vm187 = vcmp.lt.s32.totalorder %v186, 197
    %v188 = vsel %vm187, %v183, %v11
    %s189 = scalar_lea.vmem [#allocation17], 104
    %s191 = ssub.s32 256, 1
    %192 = vst [vmem:[%s189] sm:%s191] %v188
    %s193 = scalar_lea.vmem %s0, 112
    %v194 = vld [vmem:[%s193] sm:$0xff]
    %v195 = vlaneseq
    %v196 = vand.u32 %v195, 127
    %vm198 = vcmp.lt.s32.totalorder %v196, 197
    %v199 = vsel %vm198, %v194, %v11
    %s200 = scalar_lea.vmem [#allocation17], 112
    %s202 = ssub.s32 256, 1
    %203 = vst [vmem:[%s200] sm:%s202] %v199
    %s204 = scalar_lea.vmem %s0, 120
    %v205 = vld [vmem:[%s204] sm:$0xff]
    %v206 = vlaneseq
    %v207 = vand.u32 %v206, 127
    %v208 = vadd.s32 %v207, 128
    %vm209 = vcmp.lt.s32.totalorder %v208, 197
    %v210 = vsel %vm209, %v205, %v11
    %s211 = scalar_lea.vmem [#allocation17], 120
    %s213 = ssub.s32 256, 1
    %214 = vst [vmem:[%s211] sm:%s213] %v210
    %s215 = scalar_lea.vmem %s0, 128
    %v216 = vld [vmem:[%s215] sm:$0xff]
    %v217 = vlaneseq
    %v218 = vand.u32 %v217, 127
    %vm220 = vcmp.lt.s32.totalorder %v218, 197
    %v221 = vsel %vm220, %v216, %v11
    %s222 = scalar_lea.vmem [#allocation17], 128
    %s224 = ssub.s32 256, 1
    %225 = vst [vmem:[%s222] sm:%s224] %v221
    %s226 = scalar_lea.vmem %s0, 136
    %v227 = vld [vmem:[%s226] sm:$0xff]
    %v228 = vlaneseq
    %v229 = vand.u32 %v228, 127
    %v230 = vadd.s32 %v229, 128
    %vm231 = vcmp.lt.s32.totalorder %v230, 197
    %v232 = vsel %vm231, %v227, %v11
    %s233 = scalar_lea.vmem [#allocation17], 136
    %s235 = ssub.s32 256, 1
    %236 = vst [vmem:[%s233] sm:%s235] %v232
    %s237 = scalar_lea.vmem %s0, 144
    %v238 = vld [vmem:[%s237] sm:$0xff]
    %v239 = vlaneseq
    %v240 = vand.u32 %v239, 127
    %vm242 = vcmp.lt.s32.totalorder %v240, 197
    %v243 = vsel %vm242, %v238, %v11
    %s244 = scalar_lea.vmem [#allocation17], 144
    %s246 = ssub.s32 256, 1
    %247 = vst [vmem:[%s244] sm:%s246] %v243
    %s248 = scalar_lea.vmem %s0, 152
    %v249 = vld [vmem:[%s248] sm:$0xff]
    %v250 = vlaneseq
    %v251 = vand.u32 %v250, 127
    %v252 = vadd.s32 %v251, 128
    %vm253 = vcmp.lt.s32.totalorder %v252, 197
    %v254 = vsel %vm253, %v249, %v11
    %s255 = scalar_lea.vmem [#allocation17], 152
    %s257 = ssub.s32 256, 1
    %258 = vst [vmem:[%s255] sm:%s257] %v254
    %s259 = scalar_lea.vmem %s0, 160
    %v260 = vld [vmem:[%s259] sm:$0xff]
    %v261 = vlaneseq
    %v262 = vand.u32 %v261, 127
    %vm264 = vcmp.lt.s32.totalorder %v262, 197
    %v265 = vsel %vm264, %v260, %v11
    %s266 = scalar_lea.vmem [#allocation17], 160
    %s268 = ssub.s32 256, 1
    %269 = vst [vmem:[%s266] sm:%s268] %v265
    %s270 = scalar_lea.vmem %s0, 168
    %v271 = vld [vmem:[%s270] sm:$0xff]
    %v272 = vlaneseq
    %v273 = vand.u32 %v272, 127
    %v274 = vadd.s32 %v273, 128
    %vm275 = vcmp.lt.s32.totalorder %v274, 197
    %v276 = vsel %vm275, %v271, %v11
    %s277 = scalar_lea.vmem [#allocation17], 168
    %s279 = ssub.s32 256, 1
    %280 = vst [vmem:[%s277] sm:%s279] %v276
    %s281 = scalar_lea.vmem %s0, 176
    %v282 = vld [vmem:[%s281] sm:$0xff]
    %v283 = vlaneseq
    %v284 = vand.u32 %v283, 127
    %vm286 = vcmp.lt.s32.totalorder %v284, 197
    %v287 = vsel %vm286, %v282, %v11
    %s288 = scalar_lea.vmem [#allocation17], 176
    %s290 = ssub.s32 256, 1
    %291 = vst [vmem:[%s288] sm:%s290] %v287
    %s292 = scalar_lea.vmem %s0, 184
    %v293 = vld [vmem:[%s292] sm:$0xff]
    %v294 = vlaneseq
    %v295 = vand.u32 %v294, 127
    %v296 = vadd.s32 %v295, 128
    %vm297 = vcmp.lt.s32.totalorder %v296, 197
    %v298 = vsel %vm297, %v293, %v11
    %s299 = scalar_lea.vmem [#allocation17], 184
    %s301 = ssub.s32 256, 1
    %302 = vst [vmem:[%s299] sm:%s301] %v298
    %s303 = scalar_lea.vmem %s0, 192
    %v304 = vld [vmem:[%s303] sm:$0xff]
    %v305 = vlaneseq
    %v306 = vand.u32 %v305, 127
    %vm308 = vcmp.lt.s32.totalorder %v306, 197
    %v309 = vsel %vm308, %v304, %v11
    %s310 = scalar_lea.vmem [#allocation17], 192
    %s312 = ssub.s32 256, 1
    %313 = vst [vmem:[%s310] sm:%s312] %v309
    %s314 = scalar_lea.vmem %s0, 200
    %v315 = vld [vmem:[%s314] sm:$0xff]
    %v316 = vlaneseq
    %v317 = vand.u32 %v316, 127
    %v318 = vadd.s32 %v317, 128
    %vm319 = vcmp.lt.s32.totalorder %v318, 197
    %v320 = vsel %vm319, %v315, %v11
    %s321 = scalar_lea.vmem [#allocation17], 200
    %s323 = ssub.s32 256, 1
    %324 = vst [vmem:[%s321] sm:%s323] %v320
    %s325 = scalar_lea.vmem %s0, 208
    %v326 = vld [vmem:[%s325] sm:$0xff]
    %v327 = vlaneseq
    %v328 = vand.u32 %v327, 127
    %vm330 = vcmp.lt.s32.totalorder %v328, 197
    %v331 = vsel %vm330, %v326, %v11
    %s332 = scalar_lea.vmem [#allocation17], 208
    %s334 = ssub.s32 256, 1
    %335 = vst [vmem:[%s332] sm:%s334] %v331
    %s336 = scalar_lea.vmem %s0, 216
    %v337 = vld [vmem:[%s336] sm:$0xff]
    %v338 = vlaneseq
    %v339 = vand.u32 %v338, 127
    %v340 = vadd.s32 %v339, 128
    %vm341 = vcmp.lt.s32.totalorder %v340, 197
    %v342 = vsel %vm341, %v337, %v11
    %s343 = scalar_lea.vmem [#allocation17], 216
    %s345 = ssub.s32 256, 1
    %346 = vst [vmem:[%s343] sm:%s345] %v342
    %s347 = scalar_lea.vmem %s0, 224
    %v348 = vld [vmem:[%s347] sm:$0xff]
    %v349 = vlaneseq
    %v350 = vand.u32 %v349, 127
    %vm352 = vcmp.lt.s32.totalorder %v350, 197
    %v353 = vsel %vm352, %v348, %v11
    %s354 = scalar_lea.vmem [#allocation17], 224
    %s356 = ssub.s32 256, 1
    %357 = vst [vmem:[%s354] sm:%s356] %v353
    %s358 = scalar_lea.vmem %s0, 232
    %v359 = vld [vmem:[%s358] sm:$0xff]
    %v360 = vlaneseq
    %v361 = vand.u32 %v360, 127
    %v362 = vadd.s32 %v361, 128
    %vm363 = vcmp.lt.s32.totalorder %v362, 197
    %v364 = vsel %vm363, %v359, %v11
    %s365 = scalar_lea.vmem [#allocation17], 232
    %s367 = ssub.s32 256, 1
    %368 = vst [vmem:[%s365] sm:%s367] %v364
    %s369 = scalar_lea.vmem %s0, 240
    %v370 = vld [vmem:[%s369] sm:$0xff]
    %v371 = vlaneseq
    %v372 = vand.u32 %v371, 127
    %vm374 = vcmp.lt.s32.totalorder %v372, 197
    %v375 = vsel %vm374, %v370, %v11
    %s376 = scalar_lea.vmem [#allocation17], 240
    %s378 = ssub.s32 256, 1
    %379 = vst [vmem:[%s376] sm:%s378] %v375
    %s380 = scalar_lea.vmem %s0, 248
    %v381 = vld [vmem:[%s380] sm:$0xff]
    %v382 = vlaneseq
    %v383 = vand.u32 %v382, 127
    %v384 = vadd.s32 %v383, 128
    %vm385 = vcmp.lt.s32.totalorder %v384, 197
    %v386 = vsel %vm385, %v381, %v11
    %s387 = scalar_lea.vmem [#allocation17], 248
    %s389 = ssub.s32 256, 1
    %390 = vst [vmem:[%s387] sm:%s389] %v386
    %s391 = scalar_lea.vmem %s0, 256
    %v392 = vld [vmem:[%s391] sm:$0xff]
    %v393 = vlaneseq
    %v394 = vand.u32 %v393, 127
    %vm396 = vcmp.lt.s32.totalorder %v394, 197
    %v397 = vsel %vm396, %v392, %v11
    %s398 = scalar_lea.vmem [#allocation17], 256
    %s400 = ssub.s32 256, 1
    %401 = vst [vmem:[%s398] sm:%s400] %v397
    %s402 = scalar_lea.vmem %s0, 264
    %v403 = vld [vmem:[%s402] sm:$0xff]
    %v404 = vlaneseq
    %v405 = vand.u32 %v404, 127
    %v406 = vadd.s32 %v405, 128
    %vm407 = vcmp.lt.s32.totalorder %v406, 197
    %v408 = vsel %vm407, %v403, %v11
    %s409 = scalar_lea.vmem [#allocation17], 264
    %s411 = ssub.s32 256, 1
    %412 = vst [vmem:[%s409] sm:%s411] %v408
    %s413 = scalar_lea.vmem %s0, 272
    %v414 = vld [vmem:[%s413] sm:$0xff]
    %v415 = vlaneseq
    %v416 = vand.u32 %v415, 127
    %vm418 = vcmp.lt.s32.totalorder %v416, 197
    %v419 = vsel %vm418, %v414, %v11
    %s420 = scalar_lea.vmem [#allocation17], 272
    %s422 = ssub.s32 256, 1
    %423 = vst [vmem:[%s420] sm:%s422] %v419
    %s424 = scalar_lea.vmem %s0, 280
    %v425 = vld [vmem:[%s424] sm:$0xff]
    %v426 = vlaneseq
    %v427 = vand.u32 %v426, 127
    %v428 = vadd.s32 %v427, 128
    %vm429 = vcmp.lt.s32.totalorder %v428, 197
    %v430 = vsel %vm429, %v425, %v11
    %s431 = scalar_lea.vmem [#allocation17], 280
    %s433 = ssub.s32 256, 1
    %434 = vst [vmem:[%s431] sm:%s433] %v430
    %s435 = scalar_lea.vmem %s0, 288
    %v436 = vld [vmem:[%s435] sm:$0xff]
    %v437 = vlaneseq
    %v438 = vand.u32 %v437, 127
    %vm440 = vcmp.lt.s32.totalorder %v438, 197
    %v441 = vsel %vm440, %v436, %v11
    %s442 = scalar_lea.vmem [#allocation17], 288
    %s444 = ssub.s32 256, 1
    %445 = vst [vmem:[%s442] sm:%s444] %v441
    %s446 = scalar_lea.vmem %s0, 296
    %v447 = vld [vmem:[%s446] sm:$0xff]
    %v448 = vlaneseq
    %v449 = vand.u32 %v448, 127
    %v450 = vadd.s32 %v449, 128
    %vm451 = vcmp.lt.s32.totalorder %v450, 197
    %v452 = vsel %vm451, %v447, %v11
    %s453 = scalar_lea.vmem [#allocation17], 296
    %s455 = ssub.s32 256, 1
    %456 = vst [vmem:[%s453] sm:%s455] %v452
    %s457 = scalar_lea.vmem %s0, 304
    %v458 = vld [vmem:[%s457] sm:$0xff]
    %v459 = vlaneseq
    %v460 = vand.u32 %v459, 127
    %vm462 = vcmp.lt.s32.totalorder %v460, 197
    %v463 = vsel %vm462, %v458, %v11
    %s464 = scalar_lea.vmem [#allocation17], 304
    %s466 = ssub.s32 256, 1
    %467 = vst [vmem:[%s464] sm:%s466] %v463
    %s468 = scalar_lea.vmem %s0, 312
    %v469 = vld [vmem:[%s468] sm:$0xff]
    %v470 = vlaneseq
    %v471 = vand.u32 %v470, 127
    %v472 = vadd.s32 %v471, 128
    %vm473 = vcmp.lt.s32.totalorder %v472, 197
    %v474 = vsel %vm473, %v469, %v11
    %s475 = scalar_lea.vmem [#allocation17], 312
    %s477 = ssub.s32 256, 1
    %478 = vst [vmem:[%s475] sm:%s477] %v474
    %s479 = scalar_lea.vmem %s0, 320
    %v480 = vld [vmem:[%s479] sm:$0xff]
    %v481 = vlaneseq
    %v482 = vand.u32 %v481, 127
    %vm484 = vcmp.lt.s32.totalorder %v482, 197
    %v485 = vsel %vm484, %v480, %v11
    %s486 = scalar_lea.vmem [#allocation17], 320
    %s488 = ssub.s32 256, 1
    %489 = vst [vmem:[%s486] sm:%s488] %v485
    %s490 = scalar_lea.vmem %s0, 328
    %v491 = vld [vmem:[%s490] sm:$0xff]
    %v492 = vlaneseq
    %v493 = vand.u32 %v492, 127
    %v494 = vadd.s32 %v493, 128
    %vm495 = vcmp.lt.s32.totalorder %v494, 197
    %v496 = vsel %vm495, %v491, %v11
    %s497 = scalar_lea.vmem [#allocation17], 328
    %s499 = ssub.s32 256, 1
    %500 = vst [vmem:[%s497] sm:%s499] %v496
    %s501 = scalar_lea.vmem %s0, 336
    %v502 = vld [vmem:[%s501] sm:$0xff]
    %v503 = vlaneseq
    %v504 = vand.u32 %v503, 127
    %vm506 = vcmp.lt.s32.totalorder %v504, 197
    %v507 = vsel %vm506, %v502, %v11
    %s508 = scalar_lea.vmem [#allocation17], 336
    %s510 = ssub.s32 256, 1
    %511 = vst [vmem:[%s508] sm:%s510] %v507
    %s512 = scalar_lea.vmem %s0, 344
    %v513 = vld [vmem:[%s512] sm:$0xff]
    %v514 = vlaneseq
    %v515 = vand.u32 %v514, 127
    %v516 = vadd.s32 %v515, 128
    %vm517 = vcmp.lt.s32.totalorder %v516, 197
    %v518 = vsel %vm517, %v513, %v11
    %s519 = scalar_lea.vmem [#allocation17], 344
    %s521 = ssub.s32 256, 1
    %522 = vst [vmem:[%s519] sm:%s521] %v518
    %s523 = scalar_lea.vmem %s0, 352
    %v524 = vld [vmem:[%s523] sm:$0xff]
    %v525 = vlaneseq
    %v526 = vand.u32 %v525, 127
    %vm528 = vcmp.lt.s32.totalorder %v526, 197
    %v529 = vsel %vm528, %v524, %v11
    %s530 = scalar_lea.vmem [#allocation17], 352
    %s532 = ssub.s32 256, 1
    %533 = vst [vmem:[%s530] sm:%s532] %v529
    %s534 = scalar_lea.vmem %s0, 360
    %v535 = vld [vmem:[%s534] sm:$0xff]
    %v536 = vlaneseq
    %v537 = vand.u32 %v536, 127
    %v538 = vadd.s32 %v537, 128
    %vm539 = vcmp.lt.s32.totalorder %v538, 197
    %v540 = vsel %vm539, %v535, %v11
    %s541 = scalar_lea.vmem [#allocation17], 360
    %s543 = ssub.s32 256, 1
    %544 = vst [vmem:[%s541] sm:%s543] %v540
    %s545 = scalar_lea.vmem %s0, 368
    %v546 = vld [vmem:[%s545] sm:$0xff]
    %v547 = vlaneseq
    %v548 = vand.u32 %v547, 127
    %vm550 = vcmp.lt.s32.totalorder %v548, 197
    %v551 = vsel %vm550, %v546, %v11
    %s552 = scalar_lea.vmem [#allocation17], 368
    %s554 = ssub.s32 256, 1
    %555 = vst [vmem:[%s552] sm:%s554] %v551
    %s556 = scalar_lea.vmem %s0, 376
    %v557 = vld [vmem:[%s556] sm:$0xff]
    %v558 = vlaneseq
    %v559 = vand.u32 %v558, 127
    %v560 = vadd.s32 %v559, 128
    %vm561 = vcmp.lt.s32.totalorder %v560, 197
    %v562 = vsel %vm561, %v557, %v11
    %s563 = scalar_lea.vmem [#allocation17], 376
    %s565 = ssub.s32 256, 1
    %566 = vst [vmem:[%s563] sm:%s565] %v562
    %s567 = scalar_lea.vmem %s0, 384
    %v568 = vld [vmem:[%s567] sm:$0xff]
    %v569 = vlaneseq
    %v570 = vand.u32 %v569, 127
    %vm572 = vcmp.lt.s32.totalorder %v570, 197
    %v573 = vsel %vm572, %v568, %v11
    %s574 = scalar_lea.vmem [#allocation17], 384
    %s576 = ssub.s32 256, 1
    %577 = vst [vmem:[%s574] sm:%s576] %v573
    %s578 = scalar_lea.vmem %s0, 392
    %v579 = vld [vmem:[%s578] sm:$0xff]
    %v580 = vlaneseq
    %v581 = vand.u32 %v580, 127
    %v582 = vadd.s32 %v581, 128
    %vm583 = vcmp.lt.s32.totalorder %v582, 197
    %v584 = vsel %vm583, %v579, %v11
    %s585 = scalar_lea.vmem [#allocation17], 392
    %s587 = ssub.s32 256, 1
    %588 = vst [vmem:[%s585] sm:%s587] %v584
    %s589 = ssub.s32 0, 0
    %p590 = scmp.lt.s32.totalorder %s589, 0
    %s591 = scalar_select %p590, 0, 255
    %s592 = sand.u32 1, %s591
    %s593 = sand.u32 1, %s592
    %v594 = vld [vmem:[%s38] sm:%s593]
    %v595 = vld [vmem:[%s4] sm:$0xff]
    %v596 = vlaneseq
    %v597 = vshrl.u32 %v596, 7
    %vm599 = vcmp.lt.s32.totalorder %v597, 196
    %v600 = vsel %vm599, %v595, %v13
    %v601 = vlaneseq
    %v602 = vand.u32 %v601, 127
    %vm604 = vcmp.lt.s32.totalorder %v602, 4
    %v605 = vsel %vm604, %v600, %v13
    %v606 = vlaneseq
    %v607 = vshrl.u32 %v606, 7
    %610 = xla_tuple %v607, %v15
    %611 = xla_tuple %610
    %vm612 = vcmp.lt.s32.totalorder %v607, %v15
    %v613 = vsel %vm612, 1, 0
    %614 = xla_tuple %v613
    %615 = xla_tuple %v613, %v605, %v14
    %616 = xla_tuple %615
    %v617 = vsel %vm612, %v605, %v14
    %618 = xla_tuple %v617
    %619 = xla_tuple %v613, %v12, %v14
    %620 = xla_tuple %619
    %v621 = vsel %vm612, %v12, %v14
    %622 = xla_tuple %v621
    %623 = xla_tuple %v617, %v621
    %624 = xla_tuple %623
    %v625 = vmax.f32 %v617, %v621
    %626 = xla_tuple %v625
    %s628 = ssub.s32 256, 1
    %629 = vst [vmem:[#allocation18] sm:%s628] %v625
    %s630 = scalar_lea.vmem %s4, 8
    %v631 = vld [vmem:[%s630] sm:$0xff]
    %v632 = vlaneseq
    %v633 = vshrl.u32 %v632, 7
    %v634 = vadd.s32 %v633, 8
    %vm635 = vcmp.lt.s32.totalorder %v634, 196
    %v636 = vsel %vm635, %v631, %v13
    %v637 = vlaneseq
    %v638 = vand.u32 %v637, 127
    %vm640 = vcmp.lt.s32.totalorder %v638, 4
    %v641 = vsel %vm640, %v636, %v13
    %v642 = vlaneseq
    %v643 = vshrl.u32 %v642, 7
    %v645 = vadd.s32 %v643, 8
    %646 = xla_tuple %v645, %v15
    %647 = xla_tuple %646
    %vm648 = vcmp.lt.s32.totalorder %v645, %v15
    %v649 = vsel %vm648, 1, 0
    %650 = xla_tuple %v649
    %651 = xla_tuple %v649, %v641, %v14
    %652 = xla_tuple %651
    %v653 = vsel %vm648, %v641, %v14
    %654 = xla_tuple %v653
    %655 = xla_tuple %v649, %v12, %v14
    %656 = xla_tuple %655
    %v657 = vsel %vm648, %v12, %v14
    %658 = xla_tuple %v657
    %659 = xla_tuple %v653, %v657
    %660 = xla_tuple %659
    %v661 = vmax.f32 %v653, %v657
    %662 = xla_tuple %v661
    %s663 = scalar_lea.vmem [#allocation18], 8
    %s665 = ssub.s32 256, 1
    %666 = vst [vmem:[%s663] sm:%s665] %v661
    %s667 = scalar_lea.vmem %s4, 16
    %v668 = vld [vmem:[%s667] sm:$0xff]
    %v669 = vlaneseq
    %v670 = vshrl.u32 %v669, 7
    %v671 = vadd.s32 %v670, 16
    %vm672 = vcmp.lt.s32.totalorder %v671, 196
    %v673 = vsel %vm672, %v668, %v13
    %v674 = vlaneseq
    %v675 = vand.u32 %v674, 127
    %vm677 = vcmp.lt.s32.totalorder %v675, 4
    %v678 = vsel %vm677, %v673, %v13
    %v679 = vlaneseq
    %v680 = vshrl.u32 %v679, 7
    %v682 = vadd.s32 %v680, 16
    %683 = xla_tuple %v682, %v15
    %684 = xla_tuple %683
    %vm685 = vcmp.lt.s32.totalorder %v682, %v15
    %v686 = vsel %vm685, 1, 0
    %687 = xla_tuple %v686
    %688 = xla_tuple %v686, %v678, %v14
    %689 = xla_tuple %688
    %v690 = vsel %vm685, %v678, %v14
    %691 = xla_tuple %v690
    %692 = xla_tuple %v686, %v12, %v14
    %693 = xla_tuple %692
    %v694 = vsel %vm685, %v12, %v14
    %695 = xla_tuple %v694
    %696 = xla_tuple %v690, %v694
    %697 = xla_tuple %696
    %v698 = vmax.f32 %v690, %v694
    %699 = xla_tuple %v698
    %s700 = scalar_lea.vmem [#allocation18], 16
    %s702 = ssub.s32 256, 1
    %703 = vst [vmem:[%s700] sm:%s702] %v698
    %s704 = scalar_lea.vmem %s4, 24
    %v705 = vld [vmem:[%s704] sm:$0xff]
    %v706 = vlaneseq
    %v707 = vshrl.u32 %v706, 7
    %v708 = vadd.s32 %v707, 24
    %vm709 = vcmp.lt.s32.totalorder %v708, 196
    %v710 = vsel %vm709, %v705, %v13
    %v711 = vlaneseq
    %v712 = vand.u32 %v711, 127
    %vm714 = vcmp.lt.s32.totalorder %v712, 4
    %v715 = vsel %vm714, %v710, %v13
    %v716 = vlaneseq
    %v717 = vshrl.u32 %v716, 7
    %v719 = vadd.s32 %v717, 24
    %720 = xla_tuple %v719, %v15
    %721 = xla_tuple %720
    %vm722 = vcmp.lt.s32.totalorder %v719, %v15
    %v723 = vsel %vm722, 1, 0
    %724 = xla_tuple %v723
    %725 = xla_tuple %v723, %v715, %v14
    %726 = xla_tuple %725
    %v727 = vsel %vm722, %v715, %v14
    %728 = xla_tuple %v727
    %729 = xla_tuple %v723, %v12, %v14
    %730 = xla_tuple %729
    %v731 = vsel %vm722, %v12, %v14
    %732 = xla_tuple %v731
    %733 = xla_tuple %v727, %v731
    %734 = xla_tuple %733
    %v735 = vmax.f32 %v727, %v731
    %736 = xla_tuple %v735
    %s737 = scalar_lea.vmem [#allocation18], 24
    %s739 = ssub.s32 256, 1
    %740 = vst [vmem:[%s737] sm:%s739] %v735
    %s741 = scalar_lea.vmem %s4, 32
    %v742 = vld [vmem:[%s741] sm:$0xff]
    %v743 = vlaneseq
    %v744 = vshrl.u32 %v743, 7
    %v745 = vadd.s32 %v744, 32
    %vm746 = vcmp.lt.s32.totalorder %v745, 196
    %v747 = vsel %vm746, %v742, %v13
    %v748 = vlaneseq
    %v749 = vand.u32 %v748, 127
    %vm751 = vcmp.lt.s32.totalorder %v749, 4
    %v752 = vsel %vm751, %v747, %v13
    %v753 = vlaneseq
    %v754 = vshrl.u32 %v753, 7
    %v756 = vadd.s32 %v754, 32
    %757 = xla_tuple %v756, %v15
    %758 = xla_tuple %757
    %vm759 = vcmp.lt.s32.totalorder %v756, %v15
    %v760 = vsel %vm759, 1, 0
    %761 = xla_tuple %v760
    %762 = xla_tuple %v760, %v752, %v14
    %763 = xla_tuple %762
    %v764 = vsel %vm759, %v752, %v14
    %765 = xla_tuple %v764
    %766 = xla_tuple %v760, %v12, %v14
    %767 = xla_tuple %766
    %v768 = vsel %vm759, %v12, %v14
    %769 = xla_tuple %v768
    %770 = xla_tuple %v764, %v768
    %771 = xla_tuple %770
    %v772 = vmax.f32 %v764, %v768
    %773 = xla_tuple %v772
    %s774 = scalar_lea.vmem [#allocation18], 32
    %s776 = ssub.s32 256, 1
    %777 = vst [vmem:[%s774] sm:%s776] %v772
    %s778 = scalar_lea.vmem %s4, 40
    %v779 = vld [vmem:[%s778] sm:$0xff]
    %v780 = vlaneseq
    %v781 = vshrl.u32 %v780, 7
    %v782 = vadd.s32 %v781, 40
    %vm783 = vcmp.lt.s32.totalorder %v782, 196
    %v784 = vsel %vm783, %v779, %v13
    %v785 = vlaneseq
    %v786 = vand.u32 %v785, 127
    %vm788 = vcmp.lt.s32.totalorder %v786, 4
    %v789 = vsel %vm788, %v784, %v13
    %v790 = vlaneseq
    %v791 = vshrl.u32 %v790, 7
    %v793 = vadd.s32 %v791, 40
    %794 = xla_tuple %v793, %v15
    %795 = xla_tuple %794
    %vm796 = vcmp.lt.s32.totalorder %v793, %v15
    %v797 = vsel %vm796, 1, 0
    %798 = xla_tuple %v797
    %799 = xla_tuple %v797, %v789, %v14
    %800 = xla_tuple %799
    %v801 = vsel %vm796, %v789, %v14
    %802 = xla_tuple %v801
    %803 = xla_tuple %v797, %v12, %v14
    %804 = xla_tuple %803
    %v805 = vsel %vm796, %v12, %v14
    %806 = xla_tuple %v805
    %807 = xla_tuple %v801, %v805
    %808 = xla_tuple %807
    %v809 = vmax.f32 %v801, %v805
    %810 = xla_tuple %v809
    %s811 = scalar_lea.vmem [#allocation18], 40
    %s813 = ssub.s32 256, 1
    %814 = vst [vmem:[%s811] sm:%s813] %v809
    %s815 = scalar_lea.vmem %s4, 48
    %v816 = vld [vmem:[%s815] sm:$0xff]
    %v817 = vlaneseq
    %v818 = vshrl.u32 %v817, 7
    %v819 = vadd.s32 %v818, 48
    %vm820 = vcmp.lt.s32.totalorder %v819, 196
    %v821 = vsel %vm820, %v816, %v13
    %v822 = vlaneseq
    %v823 = vand.u32 %v822, 127
    %vm825 = vcmp.lt.s32.totalorder %v823, 4
    %v826 = vsel %vm825, %v821, %v13
    %v827 = vlaneseq
    %v828 = vshrl.u32 %v827, 7
    %v830 = vadd.s32 %v828, 48
    %831 = xla_tuple %v830, %v15
    %832 = xla_tuple %831
    %vm833 = vcmp.lt.s32.totalorder %v830, %v15
    %v834 = vsel %vm833, 1, 0
    %835 = xla_tuple %v834
    %836 = xla_tuple %v834, %v826, %v14
    %837 = xla_tuple %836
    %v838 = vsel %vm833, %v826, %v14
    %839 = xla_tuple %v838
    %840 = xla_tuple %v834, %v12, %v14
    %841 = xla_tuple %840
    %v842 = vsel %vm833, %v12, %v14
    %843 = xla_tuple %v842
    %844 = xla_tuple %v838, %v842
    %845 = xla_tuple %844
    %v846 = vmax.f32 %v838, %v842
    %847 = xla_tuple %v846
    %s848 = scalar_lea.vmem [#allocation18], 48
    %s850 = ssub.s32 256, 1
    %851 = vst [vmem:[%s848] sm:%s850] %v846
    %s852 = scalar_lea.vmem %s4, 56
    %v853 = vld [vmem:[%s852] sm:$0xff]
    %v854 = vlaneseq
    %v855 = vshrl.u32 %v854, 7
    %v856 = vadd.s32 %v855, 56
    %vm857 = vcmp.lt.s32.totalorder %v856, 196
    %v858 = vsel %vm857, %v853, %v13
    %v859 = vlaneseq
    %v860 = vand.u32 %v859, 127
    %vm862 = vcmp.lt.s32.totalorder %v860, 4
    %v863 = vsel %vm862, %v858, %v13
    %v864 = vlaneseq
    %v865 = vshrl.u32 %v864, 7
    %v867 = vadd.s32 %v865, 56
    %868 = xla_tuple %v867, %v15
    %869 = xla_tuple %868
    %vm870 = vcmp.lt.s32.totalorder %v867, %v15
    %v871 = vsel %vm870, 1, 0
    %872 = xla_tuple %v871
    %873 = xla_tuple %v871, %v863, %v14
    %874 = xla_tuple %873
    %v875 = vsel %vm870, %v863, %v14
    %876 = xla_tuple %v875
    %877 = xla_tuple %v871, %v12, %v14
    %878 = xla_tuple %877
    %v879 = vsel %vm870, %v12, %v14
    %880 = xla_tuple %v879
    %881 = xla_tuple %v875, %v879
    %882 = xla_tuple %881
    %v883 = vmax.f32 %v875, %v879
    %884 = xla_tuple %v883
    %s885 = scalar_lea.vmem [#allocation18], 56
    %s887 = ssub.s32 256, 1
    %888 = vst [vmem:[%s885] sm:%s887] %v883
    %s889 = scalar_lea.vmem %s4, 64
    %v890 = vld [vmem:[%s889] sm:$0xff]
    %v891 = vlaneseq
    %v892 = vshrl.u32 %v891, 7
    %v893 = vadd.s32 %v892, 64
    %vm894 = vcmp.lt.s32.totalorder %v893, 196
    %v895 = vsel %vm894, %v890, %v13
    %v896 = vlaneseq
    %v897 = vand.u32 %v896, 127
    %vm899 = vcmp.lt.s32.totalorder %v897, 4
    %v900 = vsel %vm899, %v895, %v13
    %v901 = vlaneseq
    %v902 = vshrl.u32 %v901, 7
    %v904 = vadd.s32 %v902, 64
    %905 = xla_tuple %v904, %v15
    %906 = xla_tuple %905
    %vm907 = vcmp.lt.s32.totalorder %v904, %v15
    %v908 = vsel %vm907, 1, 0
    %909 = xla_tuple %v908
    %910 = xla_tuple %v908, %v900, %v14
    %911 = xla_tuple %910
    %v912 = vsel %vm907, %v900, %v14
    %913 = xla_tuple %v912
    %914 = xla_tuple %v908, %v12, %v14
    %915 = xla_tuple %914
    %v916 = vsel %vm907, %v12, %v14
    %917 = xla_tuple %v916
    %918 = xla_tuple %v912, %v916
    %919 = xla_tuple %918
    %v920 = vmax.f32 %v912, %v916
    %921 = xla_tuple %v920
    %s922 = scalar_lea.vmem [#allocation18], 64
    %s924 = ssub.s32 256, 1
    %925 = vst [vmem:[%s922] sm:%s924] %v920
    %s926 = scalar_lea.vmem %s4, 72
    %v927 = vld [vmem:[%s926] sm:$0xff]
    %v928 = vlaneseq
    %v929 = vshrl.u32 %v928, 7
    %v930 = vadd.s32 %v929, 72
    %vm931 = vcmp.lt.s32.totalorder %v930, 196
    %v932 = vsel %vm931, %v927, %v13
    %v933 = vlaneseq
    %v934 = vand.u32 %v933, 127
    %vm936 = vcmp.lt.s32.totalorder %v934, 4
    %v937 = vsel %vm936, %v932, %v13
    %v938 = vlaneseq
    %v939 = vshrl.u32 %v938, 7
    %v941 = vadd.s32 %v939, 72
    %942 = xla_tuple %v941, %v15
    %943 = xla_tuple %942
    %vm944 = vcmp.lt.s32.totalorder %v941, %v15
    %v945 = vsel %vm944, 1, 0
    %946 = xla_tuple %v945
    %947 = xla_tuple %v945, %v937, %v14
    %948 = xla_tuple %947
    %v949 = vsel %vm944, %v937, %v14
    %950 = xla_tuple %v949
    %951 = xla_tuple %v945, %v12, %v14
    %952 = xla_tuple %951
    %v953 = vsel %vm944, %v12, %v14
    %954 = xla_tuple %v953
    %955 = xla_tuple %v949, %v953
    %956 = xla_tuple %955
    %v957 = vmax.f32 %v949, %v953
    %958 = xla_tuple %v957
    %s959 = scalar_lea.vmem [#allocation18], 72
    %s961 = ssub.s32 256, 1
    %962 = vst [vmem:[%s959] sm:%s961] %v957
    %s963 = scalar_lea.vmem %s4, 80
    %v964 = vld [vmem:[%s963] sm:$0xff]
    %v965 = vlaneseq
    %v966 = vshrl.u32 %v965, 7
    %v967 = vadd.s32 %v966, 80
    %vm968 = vcmp.lt.s32.totalorder %v967, 196
    %v969 = vsel %vm968, %v964, %v13
    %v970 = vlaneseq
    %v971 = vand.u32 %v970, 127
    %vm973 = vcmp.lt.s32.totalorder %v971, 4
    %v974 = vsel %vm973, %v969, %v13
    %v975 = vlaneseq
    %v976 = vshrl.u32 %v975, 7
    %v978 = vadd.s32 %v976, 80
    %979 = xla_tuple %v978, %v15
    %980 = xla_tuple %979
    %vm981 = vcmp.lt.s32.totalorder %v978, %v15
    %v982 = vsel %vm981, 1, 0
    %983 = xla_tuple %v982
    %984 = xla_tuple %v982, %v974, %v14
    %985 = xla_tuple %984
    %v986 = vsel %vm981, %v974, %v14
    %987 = xla_tuple %v986
    %988 = xla_tuple %v982, %v12, %v14
    %989 = xla_tuple %988
    %v990 = vsel %vm981, %v12, %v14
    %991 = xla_tuple %v990
    %992 = xla_tuple %v986, %v990
    %993 = xla_tuple %992
    %v994 = vmax.f32 %v986, %v990
    %995 = xla_tuple %v994
    %s996 = scalar_lea.vmem [#allocation18], 80
    %s998 = ssub.s32 256, 1
    %999 = vst [vmem:[%s996] sm:%s998] %v994
    %s1000 = scalar_lea.vmem %s4, 88
    %v1001 = vld [vmem:[%s1000] sm:$0xff]
    %v1002 = vlaneseq
    %v1003 = vshrl.u32 %v1002, 7
    %v1004 = vadd.s32 %v1003, 88
    %vm1005 = vcmp.lt.s32.totalorder %v1004, 196
    %v1006 = vsel %vm1005, %v1001, %v13
    %v1007 = vlaneseq
    %v1008 = vand.u32 %v1007, 127
    %vm1010 = vcmp.lt.s32.totalorder %v1008, 4
    %v1011 = vsel %vm1010, %v1006, %v13
    %v1012 = vlaneseq
    %v1013 = vshrl.u32 %v1012, 7
    %v1015 = vadd.s32 %v1013, 88
    %1016 = xla_tuple %v1015, %v15
    %1017 = xla_tuple %1016
    %vm1018 = vcmp.lt.s32.totalorder %v1015, %v15
    %v1019 = vsel %vm1018, 1, 0
    %1020 = xla_tuple %v1019
    %1021 = xla_tuple %v1019, %v1011, %v14
    %1022 = xla_tuple %1021
    %v1023 = vsel %vm1018, %v1011, %v14
    %1024 = xla_tuple %v1023
    %1025 = xla_tuple %v1019, %v12, %v14
    %1026 = xla_tuple %1025
    %v1027 = vsel %vm1018, %v12, %v14
    %1028 = xla_tuple %v1027
    %1029 = xla_tuple %v1023, %v1027
    %1030 = xla_tuple %1029
    %v1031 = vmax.f32 %v1023, %v1027
    %1032 = xla_tuple %v1031
    %s1033 = scalar_lea.vmem [#allocation18], 88
    %s1035 = ssub.s32 256, 1
    %1036 = vst [vmem:[%s1033] sm:%s1035] %v1031
    %s1037 = scalar_lea.vmem %s4, 96
    %v1038 = vld [vmem:[%s1037] sm:$0xff]
    %v1039 = vlaneseq
    %v1040 = vshrl.u32 %v1039, 7
    %v1041 = vadd.s32 %v1040, 96
    %vm1042 = vcmp.lt.s32.totalorder %v1041, 196
    %v1043 = vsel %vm1042, %v1038, %v13
    %v1044 = vlaneseq
    %v1045 = vand.u32 %v1044, 127
    %vm1047 = vcmp.lt.s32.totalorder %v1045, 4
    %v1048 = vsel %vm1047, %v1043, %v13
    %v1049 = vlaneseq
    %v1050 = vshrl.u32 %v1049, 7
    %v1052 = vadd.s32 %v1050, 96
    %1053 = xla_tuple %v1052, %v15
    %1054 = xla_tuple %1053
    %vm1055 = vcmp.lt.s32.totalorder %v1052, %v15
    %v1056 = vsel %vm1055, 1, 0
    %1057 = xla_tuple %v1056
    %1058 = xla_tuple %v1056, %v1048, %v14
    %1059 = xla_tuple %1058
    %v1060 = vsel %vm1055, %v1048, %v14
    %1061 = xla_tuple %v1060
    %1062 = xla_tuple %v1056, %v12, %v14
    %1063 = xla_tuple %1062
    %v1064 = vsel %vm1055, %v12, %v14
    %1065 = xla_tuple %v1064
    %1066 = xla_tuple %v1060, %v1064
    %1067 = xla_tuple %1066
    %v1068 = vmax.f32 %v1060, %v1064
    %1069 = xla_tuple %v1068
    %s1070 = scalar_lea.vmem [#allocation18], 96
    %s1072 = ssub.s32 256, 1
    %1073 = vst [vmem:[%s1070] sm:%s1072] %v1068
    %s1074 = scalar_lea.vmem %s4, 104
    %v1075 = vld [vmem:[%s1074] sm:$0xff]
    %v1076 = vlaneseq
    %v1077 = vshrl.u32 %v1076, 7
    %v1078 = vadd.s32 %v1077, 104
    %vm1079 = vcmp.lt.s32.totalorder %v1078, 196
    %v1080 = vsel %vm1079, %v1075, %v13
    %v1081 = vlaneseq
    %v1082 = vand.u32 %v1081, 127
    %vm1084 = vcmp.lt.s32.totalorder %v1082, 4
    %v1085 = vsel %vm1084, %v1080, %v13
    %v1086 = vlaneseq
    %v1087 = vshrl.u32 %v1086, 7
    %v1089 = vadd.s32 %v1087, 104
    %1090 = xla_tuple %v1089, %v15
    %1091 = xla_tuple %1090
    %vm1092 = vcmp.lt.s32.totalorder %v1089, %v15
    %v1093 = vsel %vm1092, 1, 0
    %1094 = xla_tuple %v1093
    %1095 = xla_tuple %v1093, %v1085, %v14
    %1096 = xla_tuple %1095
    %v1097 = vsel %vm1092, %v1085, %v14
    %1098 = xla_tuple %v1097
    %1099 = xla_tuple %v1093, %v12, %v14
    %1100 = xla_tuple %1099
    %v1101 = vsel %vm1092, %v12, %v14
    %1102 = xla_tuple %v1101
    %1103 = xla_tuple %v1097, %v1101
    %1104 = xla_tuple %1103
    %v1105 = vmax.f32 %v1097, %v1101
    %1106 = xla_tuple %v1105
    %s1107 = scalar_lea.vmem [#allocation18], 104
    %s1109 = ssub.s32 256, 1
    %1110 = vst [vmem:[%s1107] sm:%s1109] %v1105
    %s1111 = scalar_lea.vmem %s4, 112
    %v1112 = vld [vmem:[%s1111] sm:$0xff]
    %v1113 = vlaneseq
    %v1114 = vshrl.u32 %v1113, 7
    %v1115 = vadd.s32 %v1114, 112
    %vm1116 = vcmp.lt.s32.totalorder %v1115, 196
    %v1117 = vsel %vm1116, %v1112, %v13
    %v1118 = vlaneseq
    %v1119 = vand.u32 %v1118, 127
    %vm1121 = vcmp.lt.s32.totalorder %v1119, 4
    %v1122 = vsel %vm1121, %v1117, %v13
    %v1123 = vlaneseq
    %v1124 = vshrl.u32 %v1123, 7
    %v1126 = vadd.s32 %v1124, 112
    %1127 = xla_tuple %v1126, %v15
    %1128 = xla_tuple %1127
    %vm1129 = vcmp.lt.s32.totalorder %v1126, %v15
    %v1130 = vsel %vm1129, 1, 0
    %1131 = xla_tuple %v1130
    %1132 = xla_tuple %v1130, %v1122, %v14
    %1133 = xla_tuple %1132
    %v1134 = vsel %vm1129, %v1122, %v14
    %1135 = xla_tuple %v1134
    %1136 = xla_tuple %v1130, %v12, %v14
    %1137 = xla_tuple %1136
    %v1138 = vsel %vm1129, %v12, %v14
    %1139 = xla_tuple %v1138
    %1140 = xla_tuple %v1134, %v1138
    %1141 = xla_tuple %1140
    %v1142 = vmax.f32 %v1134, %v1138
    %1143 = xla_tuple %v1142
    %s1144 = scalar_lea.vmem [#allocation18], 112
    %s1146 = ssub.s32 256, 1
    %1147 = vst [vmem:[%s1144] sm:%s1146] %v1142
    %s1148 = scalar_lea.vmem %s4, 120
    %v1149 = vld [vmem:[%s1148] sm:$0xff]
    %v1150 = vlaneseq
    %v1151 = vshrl.u32 %v1150, 7
    %v1152 = vadd.s32 %v1151, 120
    %vm1153 = vcmp.lt.s32.totalorder %v1152, 196
    %v1154 = vsel %vm1153, %v1149, %v13
    %v1155 = vlaneseq
    %v1156 = vand.u32 %v1155, 127
    %vm1158 = vcmp.lt.s32.totalorder %v1156, 4
    %v1159 = vsel %vm1158, %v1154, %v13
    %v1160 = vlaneseq
    %v1161 = vshrl.u32 %v1160, 7
    %v1163 = vadd.s32 %v1161, 120
    %1164 = xla_tuple %v1163, %v15
    %1165 = xla_tuple %1164
    %vm1166 = vcmp.lt.s32.totalorder %v1163, %v15
    %v1167 = vsel %vm1166, 1, 0
    %1168 = xla_tuple %v1167
    %1169 = xla_tuple %v1167, %v1159, %v14
    %1170 = xla_tuple %1169
    %v1171 = vsel %vm1166, %v1159, %v14
    %1172 = xla_tuple %v1171
    %1173 = xla_tuple %v1167, %v12, %v14
    %1174 = xla_tuple %1173
    %v1175 = vsel %vm1166, %v12, %v14
    %1176 = xla_tuple %v1175
    %1177 = xla_tuple %v1171, %v1175
    %1178 = xla_tuple %1177
    %v1179 = vmax.f32 %v1171, %v1175
    %1180 = xla_tuple %v1179
    %s1181 = scalar_lea.vmem [#allocation18], 120
    %s1183 = ssub.s32 256, 1
    %1184 = vst [vmem:[%s1181] sm:%s1183] %v1179
    %s1185 = scalar_lea.vmem %s4, 128
    %v1186 = vld [vmem:[%s1185] sm:$0xff]
    %v1187 = vlaneseq
    %v1188 = vshrl.u32 %v1187, 7
    %v1189 = vadd.s32 %v1188, 128
    %vm1190 = vcmp.lt.s32.totalorder %v1189, 196
    %v1191 = vsel %vm1190, %v1186, %v13
    %v1192 = vlaneseq
    %v1193 = vand.u32 %v1192, 127
    %vm1195 = vcmp.lt.s32.totalorder %v1193, 4
    %v1196 = vsel %vm1195, %v1191, %v13
    %v1197 = vlaneseq
    %v1198 = vshrl.u32 %v1197, 7
    %v1200 = vadd.s32 %v1198, 128
    %1201 = xla_tuple %v1200, %v15
    %1202 = xla_tuple %1201
    %vm1203 = vcmp.lt.s32.totalorder %v1200, %v15
    %v1204 = vsel %vm1203, 1, 0
    %1205 = xla_tuple %v1204
    %1206 = xla_tuple %v1204, %v1196, %v14
    %1207 = xla_tuple %1206
    %v1208 = vsel %vm1203, %v1196, %v14
    %1209 = xla_tuple %v1208
    %1210 = xla_tuple %v1204, %v12, %v14
    %1211 = xla_tuple %1210
    %v1212 = vsel %vm1203, %v12, %v14
    %1213 = xla_tuple %v1212
    %1214 = xla_tuple %v1208, %v1212
    %1215 = xla_tuple %1214
    %v1216 = vmax.f32 %v1208, %v1212
    %1217 = xla_tuple %v1216
    %s1218 = scalar_lea.vmem [#allocation18], 128
    %s1220 = ssub.s32 256, 1
    %1221 = vst [vmem:[%s1218] sm:%s1220] %v1216
    %s1222 = scalar_lea.vmem %s4, 136
    %v1223 = vld [vmem:[%s1222] sm:$0xff]
    %v1224 = vlaneseq
    %v1225 = vshrl.u32 %v1224, 7
    %v1226 = vadd.s32 %v1225, 136
    %vm1227 = vcmp.lt.s32.totalorder %v1226, 196
    %v1228 = vsel %vm1227, %v1223, %v13
    %v1229 = vlaneseq
    %v1230 = vand.u32 %v1229, 127
    %vm1232 = vcmp.lt.s32.totalorder %v1230, 4
    %v1233 = vsel %vm1232, %v1228, %v13
    %v1234 = vlaneseq
    %v1235 = vshrl.u32 %v1234, 7
    %v1237 = vadd.s32 %v1235, 136
    %1238 = xla_tuple %v1237, %v15
    %1239 = xla_tuple %1238
    %vm1240 = vcmp.lt.s32.totalorder %v1237, %v15
    %v1241 = vsel %vm1240, 1, 0
    %1242 = xla_tuple %v1241
    %1243 = xla_tuple %v1241, %v1233, %v14
    %1244 = xla_tuple %1243
    %v1245 = vsel %vm1240, %v1233, %v14
    %1246 = xla_tuple %v1245
    %1247 = xla_tuple %v1241, %v12, %v14
    %1248 = xla_tuple %1247
    %v1249 = vsel %vm1240, %v12, %v14
    %1250 = xla_tuple %v1249
    %1251 = xla_tuple %v1245, %v1249
    %1252 = xla_tuple %1251
    %v1253 = vmax.f32 %v1245, %v1249
    %1254 = xla_tuple %v1253
    %s1255 = scalar_lea.vmem [#allocation18], 136
    %s1257 = ssub.s32 256, 1
    %1258 = vst [vmem:[%s1255] sm:%s1257] %v1253
    %s1259 = scalar_lea.vmem %s4, 144
    %v1260 = vld [vmem:[%s1259] sm:$0xff]
    %v1261 = vlaneseq
    %v1262 = vshrl.u32 %v1261, 7
    %v1263 = vadd.s32 %v1262, 144
    %vm1264 = vcmp.lt.s32.totalorder %v1263, 196
    %v1265 = vsel %vm1264, %v1260, %v13
    %v1266 = vlaneseq
    %v1267 = vand.u32 %v1266, 127
    %vm1269 = vcmp.lt.s32.totalorder %v1267, 4
    %v1270 = vsel %vm1269, %v1265, %v13
    %v1271 = vlaneseq
    %v1272 = vshrl.u32 %v1271, 7
    %v1274 = vadd.s32 %v1272, 144
    %1275 = xla_tuple %v1274, %v15
    %1276 = xla_tuple %1275
    %vm1277 = vcmp.lt.s32.totalorder %v1274, %v15
    %v1278 = vsel %vm1277, 1, 0
    %1279 = xla_tuple %v1278
    %1280 = xla_tuple %v1278, %v1270, %v14
    %1281 = xla_tuple %1280
    %v1282 = vsel %vm1277, %v1270, %v14
    %1283 = xla_tuple %v1282
    %1284 = xla_tuple %v1278, %v12, %v14
    %1285 = xla_tuple %1284
    %v1286 = vsel %vm1277, %v12, %v14
    %1287 = xla_tuple %v1286
    %1288 = xla_tuple %v1282, %v1286
    %1289 = xla_tuple %1288
    %v1290 = vmax.f32 %v1282, %v1286
    %1291 = xla_tuple %v1290
    %s1292 = scalar_lea.vmem [#allocation18], 144
    %s1294 = ssub.s32 256, 1
    %1295 = vst [vmem:[%s1292] sm:%s1294] %v1290
    %s1296 = scalar_lea.vmem %s4, 152
    %v1297 = vld [vmem:[%s1296] sm:$0xff]
    %v1298 = vlaneseq
    %v1299 = vshrl.u32 %v1298, 7
    %v1300 = vadd.s32 %v1299, 152
    %vm1301 = vcmp.lt.s32.totalorder %v1300, 196
    %v1302 = vsel %vm1301, %v1297, %v13
    %v1303 = vlaneseq
    %v1304 = vand.u32 %v1303, 127
    %vm1306 = vcmp.lt.s32.totalorder %v1304, 4
    %v1307 = vsel %vm1306, %v1302, %v13
    %v1308 = vlaneseq
    %v1309 = vshrl.u32 %v1308, 7
    %v1311 = vadd.s32 %v1309, 152
    %1312 = xla_tuple %v1311, %v15
    %1313 = xla_tuple %1312
    %vm1314 = vcmp.lt.s32.totalorder %v1311, %v15
    %v1315 = vsel %vm1314, 1, 0
    %1316 = xla_tuple %v1315
    %1317 = xla_tuple %v1315, %v1307, %v14
    %1318 = xla_tuple %1317
    %v1319 = vsel %vm1314, %v1307, %v14
    %1320 = xla_tuple %v1319
    %1321 = xla_tuple %v1315, %v12, %v14
    %1322 = xla_tuple %1321
    %v1323 = vsel %vm1314, %v12, %v14
    %1324 = xla_tuple %v1323
    %1325 = xla_tuple %v1319, %v1323
    %1326 = xla_tuple %1325
    %v1327 = vmax.f32 %v1319, %v1323
    %1328 = xla_tuple %v1327
    %s1329 = scalar_lea.vmem [#allocation18], 152
    %s1331 = ssub.s32 256, 1
    %1332 = vst [vmem:[%s1329] sm:%s1331] %v1327
    %s1333 = scalar_lea.vmem %s4, 160
    %v1334 = vld [vmem:[%s1333] sm:$0xff]
    %v1335 = vlaneseq
    %v1336 = vshrl.u32 %v1335, 7
    %v1337 = vadd.s32 %v1336, 160
    %vm1338 = vcmp.lt.s32.totalorder %v1337, 196
    %v1339 = vsel %vm1338, %v1334, %v13
    %v1340 = vlaneseq
    %v1341 = vand.u32 %v1340, 127
    %vm1343 = vcmp.lt.s32.totalorder %v1341, 4
    %v1344 = vsel %vm1343, %v1339, %v13
    %v1345 = vlaneseq
    %v1346 = vshrl.u32 %v1345, 7
    %v1348 = vadd.s32 %v1346, 160
    %1349 = xla_tuple %v1348, %v15
    %1350 = xla_tuple %1349
    %vm1351 = vcmp.lt.s32.totalorder %v1348, %v15
    %v1352 = vsel %vm1351, 1, 0
    %1353 = xla_tuple %v1352
    %1354 = xla_tuple %v1352, %v1344, %v14
    %1355 = xla_tuple %1354
    %v1356 = vsel %vm1351, %v1344, %v14
    %1357 = xla_tuple %v1356
    %1358 = xla_tuple %v1352, %v12, %v14
    %1359 = xla_tuple %1358
    %v1360 = vsel %vm1351, %v12, %v14
    %1361 = xla_tuple %v1360
    %1362 = xla_tuple %v1356, %v1360
    %1363 = xla_tuple %1362
    %v1364 = vmax.f32 %v1356, %v1360
    %1365 = xla_tuple %v1364
    %s1366 = scalar_lea.vmem [#allocation18], 160
    %s1368 = ssub.s32 256, 1
    %1369 = vst [vmem:[%s1366] sm:%s1368] %v1364
    %s1370 = scalar_lea.vmem %s4, 168
    %v1371 = vld [vmem:[%s1370] sm:$0xff]
    %v1372 = vlaneseq
    %v1373 = vshrl.u32 %v1372, 7
    %v1374 = vadd.s32 %v1373, 168
    %vm1375 = vcmp.lt.s32.totalorder %v1374, 196
    %v1376 = vsel %vm1375, %v1371, %v13
    %v1377 = vlaneseq
    %v1378 = vand.u32 %v1377, 127
    %vm1380 = vcmp.lt.s32.totalorder %v1378, 4
    %v1381 = vsel %vm1380, %v1376, %v13
    %v1382 = vlaneseq
    %v1383 = vshrl.u32 %v1382, 7
    %v1385 = vadd.s32 %v1383, 168
    %1386 = xla_tuple %v1385, %v15
    %1387 = xla_tuple %1386
    %vm1388 = vcmp.lt.s32.totalorder %v1385, %v15
    %v1389 = vsel %vm1388, 1, 0
    %1390 = xla_tuple %v1389
    %1391 = xla_tuple %v1389, %v1381, %v14
    %1392 = xla_tuple %1391
    %v1393 = vsel %vm1388, %v1381, %v14
    %1394 = xla_tuple %v1393
    %1395 = xla_tuple %v1389, %v12, %v14
    %1396 = xla_tuple %1395
    %v1397 = vsel %vm1388, %v12, %v14
    %1398 = xla_tuple %v1397
    %1399 = xla_tuple %v1393, %v1397
    %1400 = xla_tuple %1399
    %v1401 = vmax.f32 %v1393, %v1397
    %1402 = xla_tuple %v1401
    %s1403 = scalar_lea.vmem [#allocation18], 168
    %s1405 = ssub.s32 256, 1
    %1406 = vst [vmem:[%s1403] sm:%s1405] %v1401
    %s1407 = scalar_lea.vmem %s4, 176
    %v1408 = vld [vmem:[%s1407] sm:$0xff]
    %v1409 = vlaneseq
    %v1410 = vshrl.u32 %v1409, 7
    %v1411 = vadd.s32 %v1410, 176
    %vm1412 = vcmp.lt.s32.totalorder %v1411, 196
    %v1413 = vsel %vm1412, %v1408, %v13
    %v1414 = vlaneseq
    %v1415 = vand.u32 %v1414, 127
    %vm1417 = vcmp.lt.s32.totalorder %v1415, 4
    %v1418 = vsel %vm1417, %v1413, %v13
    %v1419 = vlaneseq
    %v1420 = vshrl.u32 %v1419, 7
    %v1422 = vadd.s32 %v1420, 176
    %1423 = xla_tuple %v1422, %v15
    %1424 = xla_tuple %1423
    %vm1425 = vcmp.lt.s32.totalorder %v1422, %v15
    %v1426 = vsel %vm1425, 1, 0
    %1427 = xla_tuple %v1426
    %1428 = xla_tuple %v1426, %v1418, %v14
    %1429 = xla_tuple %1428
    %v1430 = vsel %vm1425, %v1418, %v14
    %1431 = xla_tuple %v1430
    %1432 = xla_tuple %v1426, %v12, %v14
    %1433 = xla_tuple %1432
    %v1434 = vsel %vm1425, %v12, %v14
    %1435 = xla_tuple %v1434
    %1436 = xla_tuple %v1430, %v1434
    %1437 = xla_tuple %1436
    %v1438 = vmax.f32 %v1430, %v1434
    %1439 = xla_tuple %v1438
    %s1440 = scalar_lea.vmem [#allocation18], 176
    %s1442 = ssub.s32 256, 1
    %1443 = vst [vmem:[%s1440] sm:%s1442] %v1438
    %s1444 = scalar_lea.vmem %s4, 184
    %v1445 = vld [vmem:[%s1444] sm:$0xff]
    %v1446 = vlaneseq
    %v1447 = vshrl.u32 %v1446, 7
    %v1448 = vadd.s32 %v1447, 184
    %vm1449 = vcmp.lt.s32.totalorder %v1448, 196
    %v1450 = vsel %vm1449, %v1445, %v13
    %v1451 = vlaneseq
    %v1452 = vand.u32 %v1451, 127
    %vm1454 = vcmp.lt.s32.totalorder %v1452, 4
    %v1455 = vsel %vm1454, %v1450, %v13
    %v1456 = vlaneseq
    %v1457 = vshrl.u32 %v1456, 7
    %v1459 = vadd.s32 %v1457, 184
    %1460 = xla_tuple %v1459, %v15
    %1461 = xla_tuple %1460
    %vm1462 = vcmp.lt.s32.totalorder %v1459, %v15
    %v1463 = vsel %vm1462, 1, 0
    %1464 = xla_tuple %v1463
    %1465 = xla_tuple %v1463, %v1455, %v14
    %1466 = xla_tuple %1465
    %v1467 = vsel %vm1462, %v1455, %v14
    %1468 = xla_tuple %v1467
    %1469 = xla_tuple %v1463, %v12, %v14
    %1470 = xla_tuple %1469
    %v1471 = vsel %vm1462, %v12, %v14
    %1472 = xla_tuple %v1471
    %1473 = xla_tuple %v1467, %v1471
    %1474 = xla_tuple %1473
    %v1475 = vmax.f32 %v1467, %v1471
    %1476 = xla_tuple %v1475
    %s1477 = scalar_lea.vmem [#allocation18], 184
    %s1479 = ssub.s32 256, 1
    %1480 = vst [vmem:[%s1477] sm:%s1479] %v1475
    %v1481 = vlaneseq
    %v1482 = vshrl.u32 %v1481, 7
    %v1483 = vadd.s32 %v1482, 200
    %vm1484 = vcmp.lt.s32.totalorder %v1483, 201
    %v1485 = vsel %vm1484, %v594, %v12
    %v1486 = vlaneseq
    %v1487 = vand.u32 %v1486, 127
    %vm1489 = vcmp.lt.s32.totalorder %v1487, 4
    %v1490 = vsel %vm1489, %v1485, %v12
    %vm1491 = vcmask 1043456
    %v1492 = vsel %vm1491, %v1490, %v12
    %v1493 = vrot.slane %v1492, 4
    %s1494 = scalar_lea.vmem %s4, 192
    %v1495 = vld [vmem:[%s1494] sm:$0xff]
    %v1496 = vlaneseq
    %v1497 = vshrl.u32 %v1496, 7
    %v1498 = vadd.s32 %v1497, 192
    %vm1499 = vcmp.lt.s32.totalorder %v1498, 196
    %v1500 = vsel %vm1499, %v1495, %v13
    %v1501 = vlaneseq
    %v1502 = vand.u32 %v1501, 127
    %vm1504 = vcmp.lt.s32.totalorder %v1502, 4
    %v1505 = vsel %vm1504, %v1500, %v13
    %v1506 = vlaneseq
    %v1507 = vshrl.u32 %v1506, 7
    %v1509 = vadd.s32 %v1507, 192
    %1510 = xla_tuple %v1509, %v15
    %1511 = xla_tuple %1510
    %vm1512 = vcmp.lt.s32.totalorder %v1509, %v15
    %v1513 = vsel %vm1512, 1, 0
    %1514 = xla_tuple %v1513
    %1515 = xla_tuple %v1513, %v1505, %v14
    %1516 = xla_tuple %1515
    %v1517 = vsel %vm1512, %v1505, %v14
    %1518 = xla_tuple %v1517
    %1519 = xla_tuple %v1513, %v1493, %v14
    %1520 = xla_tuple %1519
    %v1521 = vsel %vm1512, %v1493, %v14
    %1522 = xla_tuple %v1521
    %1523 = xla_tuple %v1517, %v1521
    %1524 = xla_tuple %1523
    %v1525 = vmax.f32 %v1517, %v1521
    %1526 = xla_tuple %v1525
    %s1527 = scalar_lea.vmem [#allocation18], 192
    %s1529 = ssub.s32 256, 1
    %1530 = vst [vmem:[%s1527] sm:%s1529] %v1525
    %vm1531 = vcmask 1043456
    %v1532 = vsel %vm1531, %v12, %v1490
    %v1533 = vrot.slane %v1532, 4
    %v1534 = vlaneseq
    %v1535 = vshrl.u32 %v1534, 7
    %v1537 = vadd.s32 %v1535, 200
    %1538 = xla_tuple %v1537, %v15
    %1539 = xla_tuple %1538
    %vm1540 = vcmp.lt.s32.totalorder %v1537, %v15
    %v1541 = vsel %vm1540, 1, 0
    %1542 = xla_tuple %v1541
    %1543 = xla_tuple %v1541, %v13, %v14
    %1544 = xla_tuple %1543
    %v1545 = vsel %vm1540, %v13, %v14
    %1546 = xla_tuple %v1545
    %1547 = xla_tuple %v1541, %v1533, %v14
    %1548 = xla_tuple %1547
    %v1549 = vsel %vm1540, %v1533, %v14
    %1550 = xla_tuple %v1549
    %1551 = xla_tuple %v1545, %v1549
    %1552 = xla_tuple %1551
    %v1553 = vmax.f32 %v1545, %v1549
    %1554 = xla_tuple %v1553
    %s1555 = scalar_lea.vmem [#allocation18], 200
    %s1557 = ssub.s32 256, 1
    %1558 = vst [vmem:[%s1555] sm:%s1557] %v1553
    %v1559 = vlaneseq
    %v1560 = vshrl.u32 %v1559, 7
    %v1562 = vadd.s32 %v1560, 208
    %1563 = xla_tuple %v1562, %v15
    %1564 = xla_tuple %1563
    %vm1565 = vcmp.lt.s32.totalorder %v1562, %v15
    %v1566 = vsel %vm1565, 1, 0
    %1567 = xla_tuple %v1566
    %1568 = xla_tuple %v1566, %v13, %v14
    %1569 = xla_tuple %1568
    %v1570 = vsel %vm1565, %v13, %v14
    %1571 = xla_tuple %v1570
    %1572 = xla_tuple %v1566, %v12, %v14
    %1573 = xla_tuple %1572
    %v1574 = vsel %vm1565, %v12, %v14
    %1575 = xla_tuple %v1574
    %1576 = xla_tuple %v1570, %v1574
    %1577 = xla_tuple %1576
    %v1578 = vmax.f32 %v1570, %v1574
    %1579 = xla_tuple %v1578
    %s1580 = scalar_lea.vmem [#allocation18], 208
    %s1582 = ssub.s32 256, 1
    %1583 = vst [vmem:[%s1580] sm:%s1582] %v1578
    %v1584 = vlaneseq
    %v1585 = vshrl.u32 %v1584, 7
    %v1587 = vadd.s32 %v1585, 216
    %1588 = xla_tuple %v1587, %v15
    %1589 = xla_tuple %1588
    %vm1590 = vcmp.lt.s32.totalorder %v1587, %v15
    %v1591 = vsel %vm1590, 1, 0
    %1592 = xla_tuple %v1591
    %1593 = xla_tuple %v1591, %v13, %v14
    %1594 = xla_tuple %1593
    %v1595 = vsel %vm1590, %v13, %v14
    %1596 = xla_tuple %v1595
    %1597 = xla_tuple %v1591, %v12, %v14
    %1598 = xla_tuple %1597
    %v1599 = vsel %vm1590, %v12, %v14
    %1600 = xla_tuple %v1599
    %1601 = xla_tuple %v1595, %v1599
    %1602 = xla_tuple %1601
    %v1603 = vmax.f32 %v1595, %v1599
    %1604 = xla_tuple %v1603
    %s1605 = scalar_lea.vmem [#allocation18], 216
    %s1607 = ssub.s32 256, 1
    %1608 = vst [vmem:[%s1605] sm:%s1607] %v1603
    %v1609 = vlaneseq
    %v1610 = vshrl.u32 %v1609, 7
    %v1612 = vadd.s32 %v1610, 224
    %1613 = xla_tuple %v1612, %v15
    %1614 = xla_tuple %1613
    %vm1615 = vcmp.lt.s32.totalorder %v1612, %v15
    %v1616 = vsel %vm1615, 1, 0
    %1617 = xla_tuple %v1616
    %1618 = xla_tuple %v1616, %v13, %v14
    %1619 = xla_tuple %1618
    %v1620 = vsel %vm1615, %v13, %v14
    %1621 = xla_tuple %v1620
    %1622 = xla_tuple %v1616, %v12, %v14
    %1623 = xla_tuple %1622
    %v1624 = vsel %vm1615, %v12, %v14
    %1625 = xla_tuple %v1624
    %1626 = xla_tuple %v1620, %v1624
    %1627 = xla_tuple %1626
    %v1628 = vmax.f32 %v1620, %v1624
    %1629 = xla_tuple %v1628
    %s1630 = scalar_lea.vmem [#allocation18], 224
    %s1632 = ssub.s32 256, 1
    %1633 = vst [vmem:[%s1630] sm:%s1632] %v1628
    %v1634 = vlaneseq
    %v1635 = vshrl.u32 %v1634, 7
    %v1637 = vadd.s32 %v1635, 232
    %1638 = xla_tuple %v1637, %v15
    %1639 = xla_tuple %1638
    %vm1640 = vcmp.lt.s32.totalorder %v1637, %v15
    %v1641 = vsel %vm1640, 1, 0
    %1642 = xla_tuple %v1641
    %1643 = xla_tuple %v1641, %v13, %v14
    %1644 = xla_tuple %1643
    %v1645 = vsel %vm1640, %v13, %v14
    %1646 = xla_tuple %v1645
    %1647 = xla_tuple %v1641, %v12, %v14
    %1648 = xla_tuple %1647
    %v1649 = vsel %vm1640, %v12, %v14
    %1650 = xla_tuple %v1649
    %1651 = xla_tuple %v1645, %v1649
    %1652 = xla_tuple %1651
    %v1653 = vmax.f32 %v1645, %v1649
    %1654 = xla_tuple %v1653
    %s1655 = scalar_lea.vmem [#allocation18], 232
    %s1657 = ssub.s32 256, 1
    %1658 = vst [vmem:[%s1655] sm:%s1657] %v1653
    %v1659 = vlaneseq
    %v1660 = vshrl.u32 %v1659, 7
    %v1662 = vadd.s32 %v1660, 240
    %1663 = xla_tuple %v1662, %v15
    %1664 = xla_tuple %1663
    %vm1665 = vcmp.lt.s32.totalorder %v1662, %v15
    %v1666 = vsel %vm1665, 1, 0
    %1667 = xla_tuple %v1666
    %1668 = xla_tuple %v1666, %v13, %v14
    %1669 = xla_tuple %1668
    %v1670 = vsel %vm1665, %v13, %v14
    %1671 = xla_tuple %v1670
    %1672 = xla_tuple %v1666, %v12, %v14
    %1673 = xla_tuple %1672
    %v1674 = vsel %vm1665, %v12, %v14
    %1675 = xla_tuple %v1674
    %1676 = xla_tuple %v1670, %v1674
    %1677 = xla_tuple %1676
    %v1678 = vmax.f32 %v1670, %v1674
    %1679 = xla_tuple %v1678
    %s1680 = scalar_lea.vmem [#allocation18], 240
    %s1682 = ssub.s32 256, 1
    %1683 = vst [vmem:[%s1680] sm:%s1682] %v1678
    %v1684 = vlaneseq
    %v1685 = vshrl.u32 %v1684, 7
    %v1687 = vadd.s32 %v1685, 248
    %1688 = xla_tuple %v1687, %v15
    %1689 = xla_tuple %1688
    %vm1690 = vcmp.lt.s32.totalorder %v1687, %v15
    %v1691 = vsel %vm1690, 1, 0
    %1692 = xla_tuple %v1691
    %1693 = xla_tuple %v1691, %v13, %v14
    %1694 = xla_tuple %1693
    %v1695 = vsel %vm1690, %v13, %v14
    %1696 = xla_tuple %v1695
    %1697 = xla_tuple %v1691, %v12, %v14
    %1698 = xla_tuple %1697
    %v1699 = vsel %vm1690, %v12, %v14
    %1700 = xla_tuple %v1699
    %1701 = xla_tuple %v1695, %v1699
    %1702 = xla_tuple %1701
    %v1703 = vmax.f32 %v1695, %v1699
    %1704 = xla_tuple %v1703
    %s1705 = scalar_lea.vmem [#allocation18], 248
    %s1707 = ssub.s32 256, 1
    %1708 = vst [vmem:[%s1705] sm:%s1707] %v1703
    %v1709 = vld [vmem:[#allocation17] sm:$0xff]
    %v1710 = vld [vmem:[#allocation17 + $0x8] sm:$0xff]
    %v1711 = vld [vmem:[#allocation17 + $0x10] sm:$0xff]
    %v1712 = vld [vmem:[#allocation17 + $0x18] sm:$0xff]
    %v1713 = vld [vmem:[#allocation17 + $0x20] sm:$0xff]
    %v1714 = vld [vmem:[#allocation17 + $0x28] sm:$0xff]
    %v1715 = vld [vmem:[#allocation17 + $0x30] sm:$0xff]
    %v1716 = vld [vmem:[#allocation17 + $0x38] sm:$0xff]
    %v1717 = vld [vmem:[#allocation17 + $0x40] sm:$0xff]
    %v1718 = vld [vmem:[#allocation17 + $0x48] sm:$0xff]
    %v1719 = vld [vmem:[#allocation17 + $0x50] sm:$0xff]
    %v1720 = vld [vmem:[#allocation17 + $0x58] sm:$0xff]
    %v1721 = vld [vmem:[#allocation17 + $0x60] sm:$0xff]
    %v1722 = vld [vmem:[#allocation17 + $0x68] sm:$0xff]
    %v1723 = vld [vmem:[#allocation17 + $0x70] sm:$0xff]
    %v1724 = vld [vmem:[#allocation17 + $0x78] sm:$0xff]
    %v1725 = vld [vmem:[#allocation17 + $0x80] sm:$0xff]
    %v1726 = vld [vmem:[#allocation17 + $0x88] sm:$0xff]
    %v1727 = vld [vmem:[#allocation17 + $0x90] sm:$0xff]
    %v1728 = vld [vmem:[#allocation17 + $0x98] sm:$0xff]
    %v1729 = vld [vmem:[#allocation17 + $0xa0] sm:$0xff]
    %v1730 = vld [vmem:[#allocation17 + $0xa8] sm:$0xff]
    %v1731 = vld [vmem:[#allocation17 + $0xb0] sm:$0xff]
    %v1732 = vld [vmem:[#allocation17 + $0xb8] sm:$0xff]
    %v1733 = vld [vmem:[#allocation17 + $0xc0] sm:$0xff]
    %v1734 = vld [vmem:[#allocation17 + $0xc8] sm:$0xff]
    %v1735 = vld [vmem:[#allocation17 + $0xd0] sm:$0xff]
    %v1736 = vld [vmem:[#allocation17 + $0xd8] sm:$0xff]
    %v1737 = vld [vmem:[#allocation17 + $0xe0] sm:$0xff]
    %v1738 = vld [vmem:[#allocation17 + $0xe8] sm:$0xff]
    %v1739 = vld [vmem:[#allocation17 + $0xf0] sm:$0xff]
    %v1740 = vld [vmem:[#allocation17 + $0xf8] sm:$0xff]
    %v1741 = vld [vmem:[#allocation17 + $0x100] sm:$0xff]
    %v1742 = vld [vmem:[#allocation17 + $0x108] sm:$0xff]
    %v1743 = vld [vmem:[#allocation17 + $0x110] sm:$0xff]
    %v1744 = vld [vmem:[#allocation17 + $0x118] sm:$0xff]
    %v1745 = vld [vmem:[#allocation17 + $0x120] sm:$0xff]
    %v1746 = vld [vmem:[#allocation17 + $0x128] sm:$0xff]
    %v1747 = vld [vmem:[#allocation17 + $0x130] sm:$0xff]
    %v1748 = vld [vmem:[#allocation17 + $0x138] sm:$0xff]
    %v1749 = vld [vmem:[#allocation17 + $0x140] sm:$0xff]
    %v1750 = vld [vmem:[#allocation17 + $0x148] sm:$0xff]
    %v1751 = vld [vmem:[#allocation17 + $0x150] sm:$0xff]
    %v1752 = vld [vmem:[#allocation17 + $0x158] sm:$0xff]
    %v1753 = vld [vmem:[#allocation17 + $0x160] sm:$0xff]
    %v1754 = vld [vmem:[#allocation17 + $0x168] sm:$0xff]
    %v1755 = vld [vmem:[#allocation17 + $0x170] sm:$0xff]
    %v1756 = vld [vmem:[#allocation17 + $0x178] sm:$0xff]
    %v1757 = vld [vmem:[#allocation17 + $0x180] sm:$0xff]
    %v1758 = vld [vmem:[#allocation17 + $0x188] sm:$0xff]
    %v1759 = vld [vmem:[#allocation18] sm:$0xff]
    %v1760 = vld [vmem:[#allocation18 + $0x8] sm:$0xff]
    %v1761 = vld [vmem:[#allocation18 + $0x10] sm:$0xff]
    %v1762 = vld [vmem:[#allocation18 + $0x18] sm:$0xff]
    %v1763 = vld [vmem:[#allocation18 + $0x20] sm:$0xff]
    %v1764 = vld [vmem:[#allocation18 + $0x28] sm:$0xff]
    %v1765 = vld [vmem:[#allocation18 + $0x30] sm:$0xff]
    %v1766 = vld [vmem:[#allocation18 + $0x38] sm:$0xff]
    %v1767 = vld [vmem:[#allocation18 + $0x40] sm:$0xff]
    %v1768 = vld [vmem:[#allocation18 + $0x48] sm:$0xff]
    %v1769 = vld [vmem:[#allocation18 + $0x50] sm:$0xff]
    %v1770 = vld [vmem:[#allocation18 + $0x58] sm:$0xff]
    %v1771 = vld [vmem:[#allocation18 + $0x60] sm:$0xff]
    %v1772 = vld [vmem:[#allocation18 + $0x68] sm:$0xff]
    %v1773 = vld [vmem:[#allocation18 + $0x70] sm:$0xff]
    %v1774 = vld [vmem:[#allocation18 + $0x78] sm:$0xff]
    %v1775 = vld [vmem:[#allocation18 + $0x80] sm:$0xff]
    %v1776 = vld [vmem:[#allocation18 + $0x88] sm:$0xff]
    %v1777 = vld [vmem:[#allocation18 + $0x90] sm:$0xff]
    %v1778 = vld [vmem:[#allocation18 + $0x98] sm:$0xff]
    %v1779 = vld [vmem:[#allocation18 + $0xa0] sm:$0xff]
    %v1780 = vld [vmem:[#allocation18 + $0xa8] sm:$0xff]
    %v1781 = vld [vmem:[#allocation18 + $0xb0] sm:$0xff]
    %v1782 = vld [vmem:[#allocation18 + $0xb8] sm:$0xff]
    %v1783 = vld [vmem:[#allocation18 + $0xc0] sm:$0xff]
    %v1784 = vld [vmem:[#allocation18 + $0xc8] sm:$0xff]
    %v1785 = vld [vmem:[#allocation18 + $0xd0] sm:$0xff]
    %v1786 = vld [vmem:[#allocation18 + $0xd8] sm:$0xff]
    %v1787 = vld [vmem:[#allocation18 + $0xe0] sm:$0xff]
    %v1788 = vld [vmem:[#allocation18 + $0xe8] sm:$0xff]
    %v1789 = vld [vmem:[#allocation18 + $0xf0] sm:$0xff]
    %v1790 = vld [vmem:[#allocation18 + $0xf8] sm:$0xff]
    %1791 = vmatpush.msra.mxu0 %v1774
    %1792 = vmatpush.msra.mxu0 %v1773
    %1793 = vmatpush.msra.mxu0 %v1772
    %1794 = vmatpush.msra.mxu0 %v1771
    %1795 = vmatpush.msra.mxu0 %v1770
    %1796 = vmatpush.msra.mxu0 %v1769
    %1797 = vmatpush.msra.mxu0 %v1768
    %1798 = vmatpush.msra.mxu0 %v1767
    %1799 = vmatpush.msra.mxu0 %v1766
    %1800 = vmatpush.msra.mxu0 %v1765
    %1801 = vmatpush.msra.mxu0 %v1764
    %1802 = vmatpush.msra.mxu0 %v1763
    %1803 = vmatpush.msra.mxu0 %v1762
    %1804 = vmatpush.msra.mxu0 %v1761
    %1805 = vmatpush.msra.mxu0 %v1760
    %1806 = vmatpush.msra.mxu0 %v1759
    %1807 = vmatmul.f32.gmra.mxu0 %v1709
    %v1808 = vpop.f32.mrf.mxu0
    %v1809 = vadd.f32 0.0, %v1808
    %1810 = vmatmul.f32.gmra.mxu0 %v1711
    %v1811 = vpop.f32.mrf.mxu0
    %v1812 = vadd.f32 0.0, %v1811
    %1813 = vmatmul.f32.gmra.mxu0 %v1713
    %v1814 = vpop.f32.mrf.mxu0
    %v1815 = vadd.f32 0.0, %v1814
    %1816 = vmatmul.f32.gmra.mxu0 %v1715
    %v1817 = vpop.f32.mrf.mxu0
    %v1818 = vadd.f32 0.0, %v1817
    %1819 = vmatmul.f32.gmra.mxu0 %v1717
    %v1820 = vpop.f32.mrf.mxu0
    %v1821 = vadd.f32 0.0, %v1820
    %1822 = vmatmul.f32.gmra.mxu0 %v1719
    %v1823 = vpop.f32.mrf.mxu0
    %v1824 = vadd.f32 0.0, %v1823
    %1825 = vmatmul.f32.gmra.mxu0 %v1721
    %v1826 = vpop.f32.mrf.mxu0
    %v1827 = vadd.f32 0.0, %v1826
    %1828 = vmatmul.f32.gmra.mxu0 %v1723
    %v1829 = vpop.f32.mrf.mxu0
    %v1830 = vadd.f32 0.0, %v1829
    %1831 = vmatmul.f32.gmra.mxu0 %v1725
    %v1832 = vpop.f32.mrf.mxu0
    %v1833 = vadd.f32 0.0, %v1832
    %1834 = vmatmul.f32.gmra.mxu0 %v1727
    %v1835 = vpop.f32.mrf.mxu0
    %v1836 = vadd.f32 0.0, %v1835
    %1837 = vmatmul.f32.gmra.mxu0 %v1729
    %v1838 = vpop.f32.mrf.mxu0
    %v1839 = vadd.f32 0.0, %v1838
    %1840 = vmatmul.f32.gmra.mxu0 %v1731
    %v1841 = vpop.f32.mrf.mxu0
    %v1842 = vadd.f32 0.0, %v1841
    %1843 = vmatmul.f32.gmra.mxu0 %v1733
    %v1844 = vpop.f32.mrf.mxu0
    %v1845 = vadd.f32 0.0, %v1844
    %1846 = vmatmul.f32.gmra.mxu0 %v1735
    %v1847 = vpop.f32.mrf.mxu0
    %v1848 = vadd.f32 0.0, %v1847
    %1849 = vmatmul.f32.gmra.mxu0 %v1737
    %v1850 = vpop.f32.mrf.mxu0
    %v1851 = vadd.f32 0.0, %v1850
    %1852 = vmatmul.f32.gmra.mxu0 %v1739
    %v1853 = vpop.f32.mrf.mxu0
    %v1854 = vadd.f32 0.0, %v1853
    %1855 = vmatmul.f32.gmra.mxu0 %v1741
    %v1856 = vpop.f32.mrf.mxu0
    %v1857 = vadd.f32 0.0, %v1856
    %1858 = vmatmul.f32.gmra.mxu0 %v1743
    %v1859 = vpop.f32.mrf.mxu0
    %v1860 = vadd.f32 0.0, %v1859
    %1861 = vmatmul.f32.gmra.mxu0 %v1745
    %v1862 = vpop.f32.mrf.mxu0
    %v1863 = vadd.f32 0.0, %v1862
    %1864 = vmatmul.f32.gmra.mxu0 %v1747
    %v1865 = vpop.f32.mrf.mxu0
    %v1866 = vadd.f32 0.0, %v1865
    %1867 = vmatmul.f32.gmra.mxu0 %v1749
    %v1868 = vpop.f32.mrf.mxu0
    %v1869 = vadd.f32 0.0, %v1868
    %1870 = vmatmul.f32.gmra.mxu0 %v1751
    %v1871 = vpop.f32.mrf.mxu0
    %v1872 = vadd.f32 0.0, %v1871
    %1873 = vmatmul.f32.gmra.mxu0 %v1753
    %v1874 = vpop.f32.mrf.mxu0
    %v1875 = vadd.f32 0.0, %v1874
    %1876 = vmatmul.f32.gmra.mxu0 %v1755
    %v1877 = vpop.f32.mrf.mxu0
    %v1878 = vadd.f32 0.0, %v1877
    %1879 = vmatmul.f32.gmra.mxu0 %v1757
    %v1880 = vpop.f32.mrf.mxu0
    %v1881 = vadd.f32 0.0, %v1880
    %1882 = vdwg.mxu0
    %1883 = vmatpush.msra.mxu0 %v1790
    %1884 = vmatpush.msra.mxu0 %v1789
    %1885 = vmatpush.msra.mxu0 %v1788
    %1886 = vmatpush.msra.mxu0 %v1787
    %1887 = vmatpush.msra.mxu0 %v1786
    %1888 = vmatpush.msra.mxu0 %v1785
    %1889 = vmatpush.msra.mxu0 %v1784
    %1890 = vmatpush.msra.mxu0 %v1783
    %1891 = vmatpush.msra.mxu0 %v1782
    %1892 = vmatpush.msra.mxu0 %v1781
    %1893 = vmatpush.msra.mxu0 %v1780
    %1894 = vmatpush.msra.mxu0 %v1779
    %1895 = vmatpush.msra.mxu0 %v1778
    %1896 = vmatpush.msra.mxu0 %v1777
    %1897 = vmatpush.msra.mxu0 %v1776
    %1898 = vmatpush.msra.mxu0 %v1775
    %1899 = vmatmul.f32.gmra.mxu0 %v1710
    %v1900 = vpop.f32.mrf.mxu0
    %v1901 = vadd.f32 %v1809, %v1900
    %1902 = vmatmul.f32.gmra.mxu0 %v1712
    %v1903 = vpop.f32.mrf.mxu0
    %v1904 = vadd.f32 %v1812, %v1903
    %1905 = vmatmul.f32.gmra.mxu0 %v1714
    %v1906 = vpop.f32.mrf.mxu0
    %v1907 = vadd.f32 %v1815, %v1906
    %1908 = vmatmul.f32.gmra.mxu0 %v1716
    %v1909 = vpop.f32.mrf.mxu0
    %v1910 = vadd.f32 %v1818, %v1909
    %1911 = vmatmul.f32.gmra.mxu0 %v1718
    %v1912 = vpop.f32.mrf.mxu0
    %v1913 = vadd.f32 %v1821, %v1912
    %1914 = vmatmul.f32.gmra.mxu0 %v1720
    %v1915 = vpop.f32.mrf.mxu0
    %v1916 = vadd.f32 %v1824, %v1915
    %1917 = vmatmul.f32.gmra.mxu0 %v1722
    %v1918 = vpop.f32.mrf.mxu0
    %v1919 = vadd.f32 %v1827, %v1918
    %1920 = vmatmul.f32.gmra.mxu0 %v1724
    %v1921 = vpop.f32.mrf.mxu0
    %v1922 = vadd.f32 %v1830, %v1921
    %1923 = vmatmul.f32.gmra.mxu0 %v1726
    %v1924 = vpop.f32.mrf.mxu0
    %v1925 = vadd.f32 %v1833, %v1924
    %1926 = vmatmul.f32.gmra.mxu0 %v1728
    %v1927 = vpop.f32.mrf.mxu0
    %v1928 = vadd.f32 %v1836, %v1927
    %1929 = vmatmul.f32.gmra.mxu0 %v1730
    %v1930 = vpop.f32.mrf.mxu0
    %v1931 = vadd.f32 %v1839, %v1930
    %1932 = vmatmul.f32.gmra.mxu0 %v1732
    %v1933 = vpop.f32.mrf.mxu0
    %v1934 = vadd.f32 %v1842, %v1933
    %1935 = vmatmul.f32.gmra.mxu0 %v1734
    %v1936 = vpop.f32.mrf.mxu0
    %v1937 = vadd.f32 %v1845, %v1936
    %1938 = vmatmul.f32.gmra.mxu0 %v1736
    %v1939 = vpop.f32.mrf.mxu0
    %v1940 = vadd.f32 %v1848, %v1939
    %1941 = vmatmul.f32.gmra.mxu0 %v1738
    %v1942 = vpop.f32.mrf.mxu0
    %v1943 = vadd.f32 %v1851, %v1942
    %1944 = vmatmul.f32.gmra.mxu0 %v1740
    %v1945 = vpop.f32.mrf.mxu0
    %v1946 = vadd.f32 %v1854, %v1945
    %1947 = vmatmul.f32.gmra.mxu0 %v1742
    %v1948 = vpop.f32.mrf.mxu0
    %v1949 = vadd.f32 %v1857, %v1948
    %1950 = vmatmul.f32.gmra.mxu0 %v1744
    %v1951 = vpop.f32.mrf.mxu0
    %v1952 = vadd.f32 %v1860, %v1951
    %1953 = vmatmul.f32.gmra.mxu0 %v1746
    %v1954 = vpop.f32.mrf.mxu0
    %v1955 = vadd.f32 %v1863, %v1954
    %1956 = vmatmul.f32.gmra.mxu0 %v1748
    %v1957 = vpop.f32.mrf.mxu0
    %v1958 = vadd.f32 %v1866, %v1957
    %1959 = vmatmul.f32.gmra.mxu0 %v1750
    %v1960 = vpop.f32.mrf.mxu0
    %v1961 = vadd.f32 %v1869, %v1960
    %1962 = vmatmul.f32.gmra.mxu0 %v1752
    %v1963 = vpop.f32.mrf.mxu0
    %v1964 = vadd.f32 %v1872, %v1963
    %1965 = vmatmul.f32.gmra.mxu0 %v1754
    %v1966 = vpop.f32.mrf.mxu0
    %v1967 = vadd.f32 %v1875, %v1966
    %1968 = vmatmul.f32.gmra.mxu0 %v1756
    %v1969 = vpop.f32.mrf.mxu0
    %v1970 = vadd.f32 %v1878, %v1969
    %1971 = vmatmul.f32.gmra.mxu0 %v1758
    %v1972 = vpop.f32.mrf.mxu0
    %v1973 = vadd.f32 %v1881, %v1972
    %1974 = vdwg.mxu0
    %v1975 = vmax.f32 %v1901, 0.0
    %v1976 = vmax.f32 %v1904, 0.0
    %v1977 = vmax.f32 %v1907, 0.0
    %v1978 = vmax.f32 %v1910, 0.0
    %v1979 = vmax.f32 %v1913, 0.0
    %v1980 = vmax.f32 %v1916, 0.0
    %v1981 = vmax.f32 %v1919, 0.0
    %v1982 = vmax.f32 %v1922, 0.0
    %v1983 = vmax.f32 %v1925, 0.0
    %v1984 = vmax.f32 %v1928, 0.0
    %v1985 = vmax.f32 %v1931, 0.0
    %v1986 = vmax.f32 %v1934, 0.0
    %v1987 = vmax.f32 %v1937, 0.0
    %v1988 = vmax.f32 %v1940, 0.0
    %v1989 = vmax.f32 %v1943, 0.0
    %v1990 = vmax.f32 %v1946, 0.0
    %v1991 = vmax.f32 %v1949, 0.0
    %v1992 = vmax.f32 %v1952, 0.0
    %v1993 = vmax.f32 %v1955, 0.0
    %v1994 = vmax.f32 %v1958, 0.0
    %v1995 = vmax.f32 %v1961, 0.0
    %v1996 = vmax.f32 %v1964, 0.0
    %v1997 = vmax.f32 %v1967, 0.0
    %v1998 = vmax.f32 %v1970, 0.0
    %v1999 = vmax.f32 %v1973, 0.0
    %vm2000 = vcmask 31744
    %2001 = vst.msk [vmem:[%s6] sm:$0xff] %vm2000, %v1975
    %2002 = vst.msk [vmem:[%s6 + $0x8] sm:$0xff] %vm2000, %v1976
    %2003 = vst.msk [vmem:[%s6 + $0x10] sm:$0xff] %vm2000, %v1977
    %2004 = vst.msk [vmem:[%s6 + $0x18] sm:$0xff] %vm2000, %v1978
    %2005 = vst.msk [vmem:[%s6 + $0x20] sm:$0xff] %vm2000, %v1979
    %2006 = vst.msk [vmem:[%s6 + $0x28] sm:$0xff] %vm2000, %v1980
    %2007 = vst.msk [vmem:[%s6 + $0x30] sm:$0xff] %vm2000, %v1981
    %2008 = vst.msk [vmem:[%s6 + $0x38] sm:$0xff] %vm2000, %v1982
    %2009 = vst.msk [vmem:[%s6 + $0x40] sm:$0xff] %vm2000, %v1983
    %2010 = vst.msk [vmem:[%s6 + $0x48] sm:$0xff] %vm2000, %v1984
    %2011 = vst.msk [vmem:[%s6 + $0x50] sm:$0xff] %vm2000, %v1985
    %2012 = vst.msk [vmem:[%s6 + $0x58] sm:$0xff] %vm2000, %v1986
    %2013 = vst.msk [vmem:[%s6 + $0x60] sm:$0xff] %vm2000, %v1987
    %2014 = vst.msk [vmem:[%s6 + $0x68] sm:$0xff] %vm2000, %v1988
    %2015 = vst.msk [vmem:[%s6 + $0x70] sm:$0xff] %vm2000, %v1989
    %2016 = vst.msk [vmem:[%s6 + $0x78] sm:$0xff] %vm2000, %v1990
    %2017 = vst.msk [vmem:[%s6 + $0x80] sm:$0xff] %vm2000, %v1991
    %2018 = vst.msk [vmem:[%s6 + $0x88] sm:$0xff] %vm2000, %v1992
    %2019 = vst.msk [vmem:[%s6 + $0x90] sm:$0xff] %vm2000, %v1993
    %2020 = vst.msk [vmem:[%s6 + $0x98] sm:$0xff] %vm2000, %v1994
    %2021 = vst.msk [vmem:[%s6 + $0xa0] sm:$0xff] %vm2000, %v1995
    %2022 = vst.msk [vmem:[%s6 + $0xa8] sm:$0xff] %vm2000, %v1996
    %2023 = vst.msk [vmem:[%s6 + $0xb0] sm:$0xff] %vm2000, %v1997
    %2024 = vst.msk [vmem:[%s6 + $0xb8] sm:$0xff] %vm2000, %v1998
    %2025 = vst.msk [vmem:[%s6 + $0xc0] sm:$0xff] %vm2000, %v1999
    // Predicated region
    $region14: #{mixed_precision_net.2} parent=1 // pred_check
      _
    $region15: #{mixed_precision_net.2} parent=1 // pred_check_branch
      %2027 = sbr.rel (0) target = $region17
    $region16: #{mixed_precision_net.2} parent=1 // pred_region
      _
    $region17: #{mixed_precision_net.2} parent=1 // pred_fallthru
      _
    // Predicated region
    $region18: #{mixed_precision_net.2} parent=1 // pred_check
      _
    $region19: #{mixed_precision_net.2} parent=1 // pred_check_branch
      %2029 = sbr.rel (0) target = $region21
    $region20: #{mixed_precision_net.2} parent=1 // pred_region
      _
    $region21: #{mixed_precision_net.2} parent=1 // pred_fallthru
      _

</llo_original>
